<compile_context>
chip_gen: v5e
topology: v5e:2x2
jax: 0.10.0
libtpu: 0.0.40
codegen_flags: <defaults>
</compile_context>

<pallas_src>
import functools

import jax
import jax.numpy as jnp
from jax.experimental import pallas as pl
from jax.experimental.pallas import tpu as pltpu


def _pick_batch_block(n, cin):
    """Batch elements packed per grid step: fill the 8 f32 sublanes, divide N."""
    nb = min(n, max(1, -(-8 // max(cin, 1))))      # ceil(8 / cin), capped at N
    while n % nb != 0:
        nb -= 1
    return nb


# ---------------------------------------------------------------------------
# Pallas kernel: one grid step handles Nb batch elements.
#   col      : (1, H*W)            int32 column index per flattened pixel
#   x, y     : (Nb*Cin, H*W)       activations (batch x channel on sublanes)
#   dw1      : (9, Nb*Cin, 1)      depthwise 3x3 taps of conv1 (per-batch tiled)
#   pw1, b1  : (Nb*Cout, Nb*Cin), (Nb*Cout, 1)   BN1-folded 1x1 (block-diag)
#   dw2      : (9, Nb*Cout, 1)     depthwise 3x3 taps of conv2
#   pw2, b2  : (Nb*Cout, Nb*Cout), (Nb*Cout, 1)  BN2-folded 1x1 (block-diag)
#   out      : (Nb*Cout, H*W)
# ---------------------------------------------------------------------------
def _feature_embedding_kernel(
    col_ref, x_ref, y_ref,
    dw1_ref, pw1_ref, b1_ref,
    dw2_ref, pw2_ref, b2_ref,
    out_ref,
    *, H, W, Nb, Cin, Cout,
):
    HW = H * W
    f32 = jnp.float32
    hi = jax.lax.Precision.HIGHEST

    x = x_ref[...]                                   # (Nb*Cin, HW)
    y = y_ref[...]
    s = x + y

    # ---- 3x3 halo validity masks: built once in registers, reused by both convs.
    pos = jax.lax.broadcasted_iota(jnp.int32, (1, HW), 1)
    col = col_ref[...]                               # (1, HW) int32
    row_ok = {-1: pos >= W, 0: None, 1: pos < (H - 1) * W}
    col_ok = {-1: col >= 1, 0: None, 1: col <= (W - 2)}
    tap_ok = {}
    for di in (-1, 0, 1):
        for dj in (-1, 0, 1):
            if di == 0 and dj == 0:
                continue
            r, c = row_ok[di], col_ok[dj]
            if r is None:
                tap_ok[(di, dj)] = c
            elif c is None:
                tap_ok[(di, dj)] = r
            else:
                tap_ok[(di, dj)] = jnp.logical_and(r, c)

    def sigmoid(v):
        # exact: sigmoid(v) = 0.5*(tanh(v/2)+1); tanh runs on the EUP slot.
        return 0.5 * (jnp.tanh(0.5 * v) + 1.0)

    def depthwise3x3(v, dw_ref):
        """3x3 depthwise conv (stride 1, zero pad 1) on v: (C, HW), in registers."""
        acc = v * dw_ref[4]                          # center tap: no shift / mask
        tap = 0
        for di in (-1, 0, 1):
            for dj in (-1, 0, 1):
                if di == 0 and dj == 0:
                    tap += 1
                    continue
                # value at flat p must come from p + di*W + dj; pltpu.roll gives
                # out[p] = in[(p - shift) mod HW]  =>  shift = -(di*W + dj).
                shift = (-(di * W + dj)) % HW
                shifted = pltpu.roll(v, shift=shift, axis=1)
                shifted = jnp.where(tap_ok[(di, dj)], shifted, 0.0)
                acc = acc + shifted * dw_ref[tap]
                tap += 1
        return acc

    # ---- cosine-similarity gate (per packed batch element, per pixel) ----
    eps = 1e-8
    gates = []
    for n in range(Nb):                              # Nb is tiny & static
        xs = x_ref[n * Cin:(n + 1) * Cin, :]         # (Cin, HW) sublane group
        ys = y_ref[n * Cin:(n + 1) * Cin, :]
        dot = jnp.sum(xs * ys, axis=0, keepdims=True)
        nx2 = jnp.sum(xs * xs, axis=0, keepdims=True)
        ny2 = jnp.sum(ys * ys, axis=0, keepdims=True)
        sim = dot * jax.lax.rsqrt(jnp.maximum(nx2 * ny2, eps * eps))
        gates.append(jnp.broadcast_to(sigmoid(sim), (Cout, HW)))
    gate = jnp.concatenate(gates, axis=0)            # (Nb*Cout, HW)

    # ---- conv1: depthwise 3x3 -> BN-folded 1x1 (MXU) -> SiLU ----
    d1 = depthwise3x3(s, dw1_ref)                                        # (Nb*Cin, HW)
    z1 = jnp.dot(pw1_ref[...], d1, precision=hi,
                 preferred_element_type=f32) + b1_ref[...]               # (Nb*Cout, HW)
    sum1 = z1 * sigmoid(z1)                                              # SiLU

    # ---- gate, conv2 (same structure), residual ----
    d2 = depthwise3x3(sum1 * gate, dw2_ref)
    z2 = jnp.dot(pw2_ref[...], d2, precision=hi,
                 preferred_element_type=f32) + b2_ref[...]
    out_ref[...] = (z2 * sigmoid(z2) + sum1).astype(out_ref.dtype)


# ---------------------------------------------------------------------------
# Wrapper: NCHW in / NCHW out, PyTorch-layout parameters (inference BN folded).
# ---------------------------------------------------------------------------
def feature_embedding(x, y, params, *, bn_eps=1e-5):
    N, Cin, H, W = x.shape
    Cout = params["pw1"].shape[0]
    HW = H * W
    Nb = _pick_batch_block(N, Cin)

    def fold(dw, pw, gamma, beta, mean, var, c):
        # depthwise -> BN -> 1x1: fold BN scale into the 1x1 weight, shift into a bias.
        scale = gamma * jax.lax.rsqrt(var + bn_eps)
        shift = beta - mean * scale
        pw_mat = pw[:, :, 0, 0]                                  # (Cout, c)
        w = pw_mat * scale[None, :]
        bias = pw_mat @ shift                                    # (Cout,)
        taps = jnp.transpose(dw[:, 0].reshape(c, 9), (1, 0))     # (9, c), (ki,kj) row-major
        taps = jnp.tile(taps, (1, Nb))[:, :, None]               # (9, Nb*c, 1)
        w_bd = jnp.kron(jnp.eye(Nb, dtype=w.dtype), w)           # block-diag (Nb*Cout, Nb*c)
        bias = jnp.tile(bias, Nb).reshape(Nb * Cout, 1)
        return taps, w_bd, bias

    dw1, pw1_bd, b1 = fold(params["dw1"], params["pw1"], params["gamma1"],
                           params["beta1"], params["mean1"], params["var1"], Cin)
    dw2, pw2_bd, b2 = fold(params["dw2"], params["pw2"], params["gamma2"],
                           params["beta2"], params["mean2"], params["var2"], Cout)

    # NCHW -> (N*C, H*W): pure reshape; batch+channel stack onto sublanes
    # (full 8-sublane vregs once Nb*Cin == 8), spatial onto the lane axis.
    x2 = x.reshape(N * Cin, HW).astype(jnp.float32)
    y2 = y.reshape(N * Cin, HW).astype(jnp.float32)
    col_idx = (jnp.arange(HW, dtype=jnp.int32) % W).reshape(1, HW)

    kernel = functools.partial(_feature_embedding_kernel,
                               H=H, W=W, Nb=Nb, Cin=Cin, Cout=Cout)

    grid_spec = pltpu.PrefetchScalarGridSpec(
        num_scalar_prefetch=0,
        grid=(N // Nb,),
        in_specs=[
            pl.BlockSpec((1, HW), lambda g: (0, 0)),                  # col index
            pl.BlockSpec((Nb * Cin, HW), lambda g: (g, 0)),           # x
            pl.BlockSpec((Nb * Cin, HW), lambda g: (g, 0)),           # y
            pl.BlockSpec((9, Nb * Cin, 1), lambda g: (0, 0, 0)),      # dw1 taps
            pl.BlockSpec((Nb * Cout, Nb * Cin), lambda g: (0, 0)),    # pw1 (BN folded)
            pl.BlockSpec((Nb * Cout, 1), lambda g: (0, 0)),           # b1
            pl.BlockSpec((9, Nb * Cout, 1), lambda g: (0, 0, 0)),     # dw2 taps
            pl.BlockSpec((Nb * Cout, Nb * Cout), lambda g: (0, 0)),   # pw2 (BN folded)
            pl.BlockSpec((Nb * Cout, 1), lambda g: (0, 0)),           # b2
        ],
        out_specs=pl.BlockSpec((Nb * Cout, HW), lambda g: (g, 0)),
    )

    out = pl.pallas_call(
        kernel,
        out_shape=jax.ShapeDtypeStruct((N * Cout, HW), jnp.float32),
        grid_spec=grid_spec,
        compiler_params=pltpu.CompilerParams(dimension_semantics=("parallel",)),
    )(col_idx, x2, y2, dw1, pw1_bd, b1, dw2, pw2_bd, b2)

    return out.reshape(N, Cout, H, W)


# ---------------------------------------------------------------------------
# Pure-JAX reference (NCHW, matches the PyTorch module) for correctness check
# ---------------------------------------------------------------------------
def _sep_conv_ref(inp, dw_oihw, scale, shift, pw_oihw):
    C = inp.shape[1]
    z = jax.lax.conv_general_dilated(
        inp, dw_oihw, window_strides=(1, 1), padding=((1, 1), (1, 1)),
        dimension_numbers=("NCHW", "OIHW", "NCHW"), feature_group_count=C,
        precision=jax.lax.Precision.HIGHEST)
    z = z * scale[None, :, None, None] + shift[None, :, None, None]
    z = jnp.einsum("nchw,oc->nohw", z, pw_oihw[:, :, 0, 0],
                   precision=jax.lax.Precision.HIGHEST)
    return z * jax.nn.sigmoid(z)                                   # SiLU


def _reference(x, y, p, bn_eps=1e-5):
    scale1 = p["gamma1"] / jnp.sqrt(p["var1"] + bn_eps)
    shift1 = p["beta1"] - p["mean1"] * scale1
    scale2 = p["gamma2"] / jnp.sqrt(p["var2"] + bn_eps)
    shift2 = p["beta2"] - p["mean2"] * scale2
    s = x + y
    sum1 = _sep_conv_ref(s, p["dw1"], scale1, shift1, p["pw1"])
    dot = jnp.sum(x * y, axis=1, keepdims=True)
    nx = jnp.sqrt(jnp.sum(x * x, axis=1, keepdims=True))
    ny = jnp.sqrt(jnp.sum(y * y, axis=1, keepdims=True))
    gate = jax.nn.sigmoid(dot / jnp.maximum(nx * ny, 1e-8))
    out = _sep_conv_ref(sum1 * gate, p["dw2"], scale2, shift2, p["pw2"])
    return out + sum1


# ---------------------------------------------------------------------------
if __name__ == "__main__":
    N, Cin, Cout, H, W = 2, 4, 8, 16, 16

    key = jax.random.PRNGKey(0)
    ks = jax.random.split(key, 14)

    x = jax.random.normal(ks[0], (N, Cin, H, W), jnp.float32)
    y = jax.random.normal(ks[1], (N, Cin, H, W), jnp.float32)

    params = dict(
        dw1=0.2 * jax.random.normal(ks[2], (Cin, 1, 3, 3), jnp.float32),
        pw1=0.2 * jax.random.normal(ks[3], (Cout, Cin, 1, 1), jnp.float32),
        gamma1=1.0 + 0.1 * jax.random.normal(ks[4], (Cin,), jnp.float32),
        beta1=0.1 * jax.random.normal(ks[5], (Cin,), jnp.float32),
        mean1=0.1 * jax.random.normal(ks[6], (Cin,), jnp.float32),
        var1=1.0 + 0.1 * jax.random.uniform(ks[7], (Cin,), jnp.float32),
        dw2=0.2 * jax.random.normal(ks[8], (Cout, 1, 3, 3), jnp.float32),
        pw2=0.2 * jax.random.normal(ks[9], (Cout, Cout, 1, 1), jnp.float32),
        gamma2=1.0 + 0.1 * jax.random.normal(ks[10], (Cout,), jnp.float32),
        beta2=0.1 * jax.random.normal(ks[11], (Cout,), jnp.float32),
        mean2=0.1 * jax.random.normal(ks[12], (Cout,), jnp.float32),
        var2=1.0 + 0.1 * jax.random.uniform(ks[13], (Cout,), jnp.float32),
    )

    out = jax.block_until_ready(feature_embedding(x, y, params))
    ref = jax.block_until_ready(_reference(x, y, params))

    assert out.shape == (N, Cout, H, W)
    err = float(jnp.max(jnp.abs(out - ref)))
    assert jnp.allclose(out, ref, rtol=1e-3, atol=1e-3), \
        f"kernel/reference mismatch (max abs err {err})"

    print("KERNEL_OK")
</pallas_src>

<mosaic_0001>
module attributes {stable_mosaic.version = 11 : i64} {
  func.func @_feature_embedding_kernel(%arg0: i32, %arg1: memref<1x256xi32, #tpu.memory_space<vmem>>, %arg2: memref<8x256xf32, #tpu.memory_space<vmem>>, %arg3: memref<8x256xf32, #tpu.memory_space<vmem>>, %arg4: memref<9x8x1xf32, #tpu.memory_space<vmem>>, %arg5: memref<16x8xf32, #tpu.memory_space<vmem>>, %arg6: memref<16x1xf32, #tpu.memory_space<vmem>>, %arg7: memref<9x16x1xf32, #tpu.memory_space<vmem>>, %arg8: memref<16x16xf32, #tpu.memory_space<vmem>>, %arg9: memref<16x1xf32, #tpu.memory_space<vmem>>, %arg10: memref<16x256xf32, #tpu.memory_space<vmem>>) attributes {dimension_semantics = [#tpu.dimension_semantics<parallel>], iteration_bounds = array<i64: 1>, scalar_prefetch = 0 : i64, scratch_operands = 0 : i64, tpu.core_type = #tpu.core_type<tc>, window_params = [{pipeline_mode = #tpu.pipeline_mode<synchronous>, transform_indices = @transform_0, window_bounds = array<i64: 1, 256>}, {transform_indices = @transform_1, window_bounds = array<i64: 8, 256>}, {transform_indices = @transform_2, window_bounds = array<i64: 8, 256>}, {pipeline_mode = #tpu.pipeline_mode<synchronous>, transform_indices = @transform_3, window_bounds = array<i64: 9, 8, 1>}, {pipeline_mode = #tpu.pipeline_mode<synchronous>, transform_indices = @transform_4, window_bounds = array<i64: 16, 8>}, {pipeline_mode = #tpu.pipeline_mode<synchronous>, transform_indices = @transform_5, window_bounds = array<i64: 16, 1>}, {pipeline_mode = #tpu.pipeline_mode<synchronous>, transform_indices = @transform_6, window_bounds = array<i64: 9, 16, 1>}, {pipeline_mode = #tpu.pipeline_mode<synchronous>, transform_indices = @transform_7, window_bounds = array<i64: 16, 16>}, {pipeline_mode = #tpu.pipeline_mode<synchronous>, transform_indices = @transform_8, window_bounds = array<i64: 16, 1>}, {transform_indices = @transform_9, window_bounds = array<i64: 16, 256>}]} {
    %c0 = arith.constant 0 : index
    %c0_0 = arith.constant 0 : index
    %0 = vector.load %arg2[%c0, %c0_0] : memref<8x256xf32, #tpu.memory_space<vmem>>, vector<8x256xf32>
    %c0_1 = arith.constant 0 : index
    %c0_2 = arith.constant 0 : index
    %1 = vector.load %arg3[%c0_1, %c0_2] : memref<8x256xf32, #tpu.memory_space<vmem>>, vector<8x256xf32>
    %2 = arith.addf %0, %1 : vector<8x256xf32>
    %3 = tpu.iota {dimensions = array<i32: 1>} : vector<1x256xi32>
    %c0_3 = arith.constant 0 : index
    %c0_4 = arith.constant 0 : index
    %4 = vector.load %arg1[%c0_3, %c0_4] : memref<1x256xi32, #tpu.memory_space<vmem>>, vector<1x256xi32>
    %c16_i32 = arith.constant 16 : i32
    %5 = vector.broadcast %c16_i32 : i32 to vector<1x256xi32>
    %6 = arith.cmpi sge, %3, %5 : vector<1x256xi32>
    %c240_i32 = arith.constant 240 : i32
    %7 = vector.broadcast %c240_i32 : i32 to vector<1x256xi32>
    %8 = arith.cmpi slt, %3, %7 : vector<1x256xi32>
    %c1_i32 = arith.constant 1 : i32
    %9 = vector.broadcast %c1_i32 : i32 to vector<1x256xi32>
    %10 = arith.cmpi sge, %4, %9 : vector<1x256xi32>
    %c14_i32 = arith.constant 14 : i32
    %11 = vector.broadcast %c14_i32 : i32 to vector<1x256xi32>
    %12 = arith.cmpi sle, %4, %11 : vector<1x256xi32>
    %13 = arith.andi %6, %10 : vector<1x256xi1>
    %14 = arith.andi %6, %12 : vector<1x256xi1>
    %15 = arith.andi %8, %10 : vector<1x256xi1>
    %16 = arith.andi %8, %12 : vector<1x256xi1>
    %c0_5 = arith.constant 0 : index
    %c0_6 = arith.constant 0 : index
    %17 = vector.load %arg2[%c0_5, %c0_6] : memref<8x256xf32, #tpu.memory_space<vmem>>, vector<4x256xf32>
    %c0_7 = arith.constant 0 : index
    %c0_8 = arith.constant 0 : index
    %18 = vector.load %arg3[%c0_7, %c0_8] : memref<8x256xf32, #tpu.memory_space<vmem>>, vector<4x256xf32>
    %19 = arith.mulf %17, %18 : vector<4x256xf32>
    %cst = arith.constant dense<0.000000e+00> : vector<256xf32>
    %20 = vector.multi_reduction <add>, %19, %cst [0] : vector<4x256xf32> to vector<256xf32>
    %21 = vector.shape_cast %20 : vector<256xf32> to vector<1x256xf32>
    %22 = arith.mulf %17, %17 : vector<4x256xf32>
    %cst_9 = arith.constant dense<0.000000e+00> : vector<256xf32>
    %23 = vector.multi_reduction <add>, %22, %cst_9 [0] : vector<4x256xf32> to vector<256xf32>
    %24 = vector.shape_cast %23 : vector<256xf32> to vector<1x256xf32>
    %25 = arith.mulf %18, %18 : vector<4x256xf32>
    %cst_10 = arith.constant dense<0.000000e+00> : vector<256xf32>
    %26 = vector.multi_reduction <add>, %25, %cst_10 [0] : vector<4x256xf32> to vector<256xf32>
    %27 = vector.shape_cast %26 : vector<256xf32> to vector<1x256xf32>
    %28 = arith.mulf %24, %27 : vector<1x256xf32>
    %cst_11 = arith.constant 1.000000e-16 : f32
    %29 = vector.broadcast %cst_11 : f32 to vector<1x256xf32>
    %30 = arith.maximumf %28, %29 : vector<1x256xf32>
    %31 = math.rsqrt %30 : vector<1x256xf32>
    %32 = arith.mulf %21, %31 : vector<1x256xf32>
    %cst_12 = arith.constant 5.000000e-01 : f32
    %33 = vector.broadcast %cst_12 : f32 to vector<1x256xf32>
    %34 = arith.mulf %33, %32 : vector<1x256xf32>
    %35 = math.tanh %34 : vector<1x256xf32>
    %cst_13 = arith.constant 1.000000e+00 : f32
    %36 = vector.broadcast %cst_13 : f32 to vector<1x256xf32>
    %37 = arith.addf %35, %36 : vector<1x256xf32>
    %cst_14 = arith.constant 5.000000e-01 : f32
    %38 = vector.broadcast %cst_14 : f32 to vector<1x256xf32>
    %39 = arith.mulf %38, %37 : vector<1x256xf32>
    %40 = vector.shape_cast %39 : vector<1x256xf32> to vector<1x256xf32>
    %41 = vector.broadcast %40 : vector<1x256xf32> to vector<8x256xf32>
    %c4 = arith.constant 4 : index
    %c0_15 = arith.constant 0 : index
    %42 = vector.load %arg2[%c4, %c0_15] : memref<8x256xf32, #tpu.memory_space<vmem>>, vector<4x256xf32>
    %c4_16 = arith.constant 4 : index
    %c0_17 = arith.constant 0 : index
    %43 = vector.load %arg3[%c4_16, %c0_17] : memref<8x256xf32, #tpu.memory_space<vmem>>, vector<4x256xf32>
    %44 = arith.mulf %42, %43 : vector<4x256xf32>
    %cst_18 = arith.constant dense<0.000000e+00> : vector<256xf32>
    %45 = vector.multi_reduction <add>, %44, %cst_18 [0] : vector<4x256xf32> to vector<256xf32>
    %46 = vector.shape_cast %45 : vector<256xf32> to vector<1x256xf32>
    %47 = arith.mulf %42, %42 : vector<4x256xf32>
    %cst_19 = arith.constant dense<0.000000e+00> : vector<256xf32>
    %48 = vector.multi_reduction <add>, %47, %cst_19 [0] : vector<4x256xf32> to vector<256xf32>
    %49 = vector.shape_cast %48 : vector<256xf32> to vector<1x256xf32>
    %50 = arith.mulf %43, %43 : vector<4x256xf32>
    %cst_20 = arith.constant dense<0.000000e+00> : vector<256xf32>
    %51 = vector.multi_reduction <add>, %50, %cst_20 [0] : vector<4x256xf32> to vector<256xf32>
    %52 = vector.shape_cast %51 : vector<256xf32> to vector<1x256xf32>
    %53 = arith.mulf %49, %52 : vector<1x256xf32>
    %cst_21 = arith.constant 1.000000e-16 : f32
    %54 = vector.broadcast %cst_21 : f32 to vector<1x256xf32>
    %55 = arith.maximumf %53, %54 : vector<1x256xf32>
    %56 = math.rsqrt %55 : vector<1x256xf32>
    %57 = arith.mulf %46, %56 : vector<1x256xf32>
    %cst_22 = arith.constant 5.000000e-01 : f32
    %58 = vector.broadcast %cst_22 : f32 to vector<1x256xf32>
    %59 = arith.mulf %58, %57 : vector<1x256xf32>
    %60 = math.tanh %59 : vector<1x256xf32>
    %cst_23 = arith.constant 1.000000e+00 : f32
    %61 = vector.broadcast %cst_23 : f32 to vector<1x256xf32>
    %62 = arith.addf %60, %61 : vector<1x256xf32>
    %cst_24 = arith.constant 5.000000e-01 : f32
    %63 = vector.broadcast %cst_24 : f32 to vector<1x256xf32>
    %64 = arith.mulf %63, %62 : vector<1x256xf32>
    %65 = vector.shape_cast %64 : vector<1x256xf32> to vector<1x256xf32>
    %66 = vector.broadcast %65 : vector<1x256xf32> to vector<8x256xf32>
    %67 = tpu.concatenate %41, %66 in 0 : vector<8x256xf32>, vector<8x256xf32> -> vector<16x256xf32>
    %c4_25 = arith.constant 4 : index
    %c0_26 = arith.constant 0 : index
    %c0_27 = arith.constant 0 : index
    %68 = vector.load %arg4[%c4_25, %c0_26, %c0_27] : memref<9x8x1xf32, #tpu.memory_space<vmem>>, vector<1x8x1xf32>
    %69 = vector.shape_cast %68 : vector<1x8x1xf32> to vector<8x1xf32>
    %70 = vector.broadcast %69 : vector<8x1xf32> to vector<8x256xf32>
    %71 = arith.mulf %2, %70 : vector<8x256xf32>
    %c17_i32 = arith.constant 17 : i32
    %72 = tpu.dynamic_rotate %2 by %c17_i32 dim 1 : vector<8x256xf32>, i32 -> vector<8x256xf32>
    %cst_28 = arith.constant 0.000000e+00 : f32
    %73 = vector.shape_cast %13 : vector<1x256xi1> to vector<1x256xi1>
    %74 = vector.broadcast %73 : vector<1x256xi1> to vector<8x256xi1>
    %75 = vector.broadcast %cst_28 : f32 to vector<8x256xf32>
    %76 = arith.select %74, %72, %75 : vector<8x256xi1>, vector<8x256xf32>
    %c0_29 = arith.constant 0 : index
    %c0_30 = arith.constant 0 : index
    %c0_31 = arith.constant 0 : index
    %77 = vector.load %arg4[%c0_29, %c0_30, %c0_31] : memref<9x8x1xf32, #tpu.memory_space<vmem>>, vector<1x8x1xf32>
    %78 = vector.shape_cast %77 : vector<1x8x1xf32> to vector<8x1xf32>
    %79 = vector.broadcast %78 : vector<8x1xf32> to vector<8x256xf32>
    %80 = arith.mulf %76, %79 : vector<8x256xf32>
    %81 = arith.addf %71, %80 : vector<8x256xf32>
    %c16_i32_32 = arith.constant 16 : i32
    %82 = tpu.dynamic_rotate %2 by %c16_i32_32 dim 1 : vector<8x256xf32>, i32 -> vector<8x256xf32>
    %cst_33 = arith.constant 0.000000e+00 : f32
    %83 = vector.shape_cast %6 : vector<1x256xi1> to vector<1x256xi1>
    %84 = vector.broadcast %83 : vector<1x256xi1> to vector<8x256xi1>
    %85 = vector.broadcast %cst_33 : f32 to vector<8x256xf32>
    %86 = arith.select %84, %82, %85 : vector<8x256xi1>, vector<8x256xf32>
    %c1 = arith.constant 1 : index
    %c0_34 = arith.constant 0 : index
    %c0_35 = arith.constant 0 : index
    %87 = vector.load %arg4[%c1, %c0_34, %c0_35] : memref<9x8x1xf32, #tpu.memory_space<vmem>>, vector<1x8x1xf32>
    %88 = vector.shape_cast %87 : vector<1x8x1xf32> to vector<8x1xf32>
    %89 = vector.broadcast %88 : vector<8x1xf32> to vector<8x256xf32>
    %90 = arith.mulf %86, %89 : vector<8x256xf32>
    %91 = arith.addf %81, %90 : vector<8x256xf32>
    %c15_i32 = arith.constant 15 : i32
    %92 = tpu.dynamic_rotate %2 by %c15_i32 dim 1 : vector<8x256xf32>, i32 -> vector<8x256xf32>
    %cst_36 = arith.constant 0.000000e+00 : f32
    %93 = vector.shape_cast %14 : vector<1x256xi1> to vector<1x256xi1>
    %94 = vector.broadcast %93 : vector<1x256xi1> to vector<8x256xi1>
    %95 = vector.broadcast %cst_36 : f32 to vector<8x256xf32>
    %96 = arith.select %94, %92, %95 : vector<8x256xi1>, vector<8x256xf32>
    %c2 = arith.constant 2 : index
    %c0_37 = arith.constant 0 : index
    %c0_38 = arith.constant 0 : index
    %97 = vector.load %arg4[%c2, %c0_37, %c0_38] : memref<9x8x1xf32, #tpu.memory_space<vmem>>, vector<1x8x1xf32>
    %98 = vector.shape_cast %97 : vector<1x8x1xf32> to vector<8x1xf32>
    %99 = vector.broadcast %98 : vector<8x1xf32> to vector<8x256xf32>
    %100 = arith.mulf %96, %99 : vector<8x256xf32>
    %101 = arith.addf %91, %100 : vector<8x256xf32>
    %c1_i32_39 = arith.constant 1 : i32
    %102 = tpu.dynamic_rotate %2 by %c1_i32_39 dim 1 : vector<8x256xf32>, i32 -> vector<8x256xf32>
    %cst_40 = arith.constant 0.000000e+00 : f32
    %103 = vector.shape_cast %10 : vector<1x256xi1> to vector<1x256xi1>
    %104 = vector.broadcast %103 : vector<1x256xi1> to vector<8x256xi1>
    %105 = vector.broadcast %cst_40 : f32 to vector<8x256xf32>
    %106 = arith.select %104, %102, %105 : vector<8x256xi1>, vector<8x256xf32>
    %c3 = arith.constant 3 : index
    %c0_41 = arith.constant 0 : index
    %c0_42 = arith.constant 0 : index
    %107 = vector.load %arg4[%c3, %c0_41, %c0_42] : memref<9x8x1xf32, #tpu.memory_space<vmem>>, vector<1x8x1xf32>
    %108 = vector.shape_cast %107 : vector<1x8x1xf32> to vector<8x1xf32>
    %109 = vector.broadcast %108 : vector<8x1xf32> to vector<8x256xf32>
    %110 = arith.mulf %106, %109 : vector<8x256xf32>
    %111 = arith.addf %101, %110 : vector<8x256xf32>
    %c255_i32 = arith.constant 255 : i32
    %112 = tpu.dynamic_rotate %2 by %c255_i32 dim 1 : vector<8x256xf32>, i32 -> vector<8x256xf32>
    %cst_43 = arith.constant 0.000000e+00 : f32
    %113 = vector.shape_cast %12 : vector<1x256xi1> to vector<1x256xi1>
    %114 = vector.broadcast %113 : vector<1x256xi1> to vector<8x256xi1>
    %115 = vector.broadcast %cst_43 : f32 to vector<8x256xf32>
    %116 = arith.select %114, %112, %115 : vector<8x256xi1>, vector<8x256xf32>
    %c5 = arith.constant 5 : index
    %c0_44 = arith.constant 0 : index
    %c0_45 = arith.constant 0 : index
    %117 = vector.load %arg4[%c5, %c0_44, %c0_45] : memref<9x8x1xf32, #tpu.memory_space<vmem>>, vector<1x8x1xf32>
    %118 = vector.shape_cast %117 : vector<1x8x1xf32> to vector<8x1xf32>
    %119 = vector.broadcast %118 : vector<8x1xf32> to vector<8x256xf32>
    %120 = arith.mulf %116, %119 : vector<8x256xf32>
    %121 = arith.addf %111, %120 : vector<8x256xf32>
    %c241_i32 = arith.constant 241 : i32
    %122 = tpu.dynamic_rotate %2 by %c241_i32 dim 1 : vector<8x256xf32>, i32 -> vector<8x256xf32>
    %cst_46 = arith.constant 0.000000e+00 : f32
    %123 = vector.shape_cast %15 : vector<1x256xi1> to vector<1x256xi1>
    %124 = vector.broadcast %123 : vector<1x256xi1> to vector<8x256xi1>
    %125 = vector.broadcast %cst_46 : f32 to vector<8x256xf32>
    %126 = arith.select %124, %122, %125 : vector<8x256xi1>, vector<8x256xf32>
    %c6 = arith.constant 6 : index
    %c0_47 = arith.constant 0 : index
    %c0_48 = arith.constant 0 : index
    %127 = vector.load %arg4[%c6, %c0_47, %c0_48] : memref<9x8x1xf32, #tpu.memory_space<vmem>>, vector<1x8x1xf32>
    %128 = vector.shape_cast %127 : vector<1x8x1xf32> to vector<8x1xf32>
    %129 = vector.broadcast %128 : vector<8x1xf32> to vector<8x256xf32>
    %130 = arith.mulf %126, %129 : vector<8x256xf32>
    %131 = arith.addf %121, %130 : vector<8x256xf32>
    %c240_i32_49 = arith.constant 240 : i32
    %132 = tpu.dynamic_rotate %2 by %c240_i32_49 dim 1 : vector<8x256xf32>, i32 -> vector<8x256xf32>
    %cst_50 = arith.constant 0.000000e+00 : f32
    %133 = vector.shape_cast %8 : vector<1x256xi1> to vector<1x256xi1>
    %134 = vector.broadcast %133 : vector<1x256xi1> to vector<8x256xi1>
    %135 = vector.broadcast %cst_50 : f32 to vector<8x256xf32>
    %136 = arith.select %134, %132, %135 : vector<8x256xi1>, vector<8x256xf32>
    %c7 = arith.constant 7 : index
    %c0_51 = arith.constant 0 : index
    %c0_52 = arith.constant 0 : index
    %137 = vector.load %arg4[%c7, %c0_51, %c0_52] : memref<9x8x1xf32, #tpu.memory_space<vmem>>, vector<1x8x1xf32>
    %138 = vector.shape_cast %137 : vector<1x8x1xf32> to vector<8x1xf32>
    %139 = vector.broadcast %138 : vector<8x1xf32> to vector<8x256xf32>
    %140 = arith.mulf %136, %139 : vector<8x256xf32>
    %141 = arith.addf %131, %140 : vector<8x256xf32>
    %c239_i32 = arith.constant 239 : i32
    %142 = tpu.dynamic_rotate %2 by %c239_i32 dim 1 : vector<8x256xf32>, i32 -> vector<8x256xf32>
    %cst_53 = arith.constant 0.000000e+00 : f32
    %143 = vector.shape_cast %16 : vector<1x256xi1> to vector<1x256xi1>
    %144 = vector.broadcast %143 : vector<1x256xi1> to vector<8x256xi1>
    %145 = vector.broadcast %cst_53 : f32 to vector<8x256xf32>
    %146 = arith.select %144, %142, %145 : vector<8x256xi1>, vector<8x256xf32>
    %c8 = arith.constant 8 : index
    %c0_54 = arith.constant 0 : index
    %c0_55 = arith.constant 0 : index
    %147 = vector.load %arg4[%c8, %c0_54, %c0_55] : memref<9x8x1xf32, #tpu.memory_space<vmem>>, vector<1x8x1xf32>
    %148 = vector.shape_cast %147 : vector<1x8x1xf32> to vector<8x1xf32>
    %149 = vector.broadcast %148 : vector<8x1xf32> to vector<8x256xf32>
    %150 = arith.mulf %146, %149 : vector<8x256xf32>
    %151 = arith.addf %141, %150 : vector<8x256xf32>
    %c0_56 = arith.constant 0 : index
    %c0_57 = arith.constant 0 : index
    %152 = vector.load %arg5[%c0_56, %c0_57] : memref<16x8xf32, #tpu.memory_space<vmem>>, vector<16x8xf32>
    %cst_58 = arith.constant dense<0.000000e+00> : vector<16x256xf32>
    %153 = tpu.matmul %152, %151, %cst_58 {dimension_numbers = #tpu.dot_dimension_numbers<[1], [0], [0], [1], [0, 0, 1, 1], [], []>, precision = #tpu.contract_precision<fp32>} : vector<16x8xf32>, vector<8x256xf32>, vector<16x256xf32> -> vector<16x256xf32>
    %c0_59 = arith.constant 0 : index
    %c0_60 = arith.constant 0 : index
    %154 = vector.load %arg6[%c0_59, %c0_60] : memref<16x1xf32, #tpu.memory_space<vmem>>, vector<16x1xf32>
    %155 = vector.broadcast %154 : vector<16x1xf32> to vector<16x256xf32>
    %156 = arith.addf %153, %155 : vector<16x256xf32>
    %cst_61 = arith.constant 5.000000e-01 : f32
    %157 = vector.broadcast %cst_61 : f32 to vector<16x256xf32>
    %158 = arith.mulf %157, %156 : vector<16x256xf32>
    %159 = math.tanh %158 : vector<16x256xf32>
    %cst_62 = arith.constant 1.000000e+00 : f32
    %160 = vector.broadcast %cst_62 : f32 to vector<16x256xf32>
    %161 = arith.addf %159, %160 : vector<16x256xf32>
    %cst_63 = arith.constant 5.000000e-01 : f32
    %162 = vector.broadcast %cst_63 : f32 to vector<16x256xf32>
    %163 = arith.mulf %162, %161 : vector<16x256xf32>
    %164 = arith.mulf %156, %163 : vector<16x256xf32>
    %165 = arith.mulf %164, %67 : vector<16x256xf32>
    %c4_64 = arith.constant 4 : index
    %c0_65 = arith.constant 0 : index
    %c0_66 = arith.constant 0 : index
    %166 = vector.load %arg7[%c4_64, %c0_65, %c0_66] : memref<9x16x1xf32, #tpu.memory_space<vmem>>, vector<1x16x1xf32>
    %167 = vector.shape_cast %166 : vector<1x16x1xf32> to vector<16x1xf32>
    %168 = vector.broadcast %167 : vector<16x1xf32> to vector<16x256xf32>
    %169 = arith.mulf %165, %168 : vector<16x256xf32>
    %c17_i32_67 = arith.constant 17 : i32
    %170 = tpu.dynamic_rotate %165 by %c17_i32_67 dim 1 : vector<16x256xf32>, i32 -> vector<16x256xf32>
    %cst_68 = arith.constant 0.000000e+00 : f32
    %171 = vector.shape_cast %13 : vector<1x256xi1> to vector<1x256xi1>
    %172 = vector.broadcast %171 : vector<1x256xi1> to vector<16x256xi1>
    %173 = vector.broadcast %cst_68 : f32 to vector<16x256xf32>
    %174 = arith.select %172, %170, %173 : vector<16x256xi1>, vector<16x256xf32>
    %c0_69 = arith.constant 0 : index
    %c0_70 = arith.constant 0 : index
    %c0_71 = arith.constant 0 : index
    %175 = vector.load %arg7[%c0_69, %c0_70, %c0_71] : memref<9x16x1xf32, #tpu.memory_space<vmem>>, vector<1x16x1xf32>
    %176 = vector.shape_cast %175 : vector<1x16x1xf32> to vector<16x1xf32>
    %177 = vector.broadcast %176 : vector<16x1xf32> to vector<16x256xf32>
    %178 = arith.mulf %174, %177 : vector<16x256xf32>
    %179 = arith.addf %169, %178 : vector<16x256xf32>
    %c16_i32_72 = arith.constant 16 : i32
    %180 = tpu.dynamic_rotate %165 by %c16_i32_72 dim 1 : vector<16x256xf32>, i32 -> vector<16x256xf32>
    %cst_73 = arith.constant 0.000000e+00 : f32
    %181 = vector.shape_cast %6 : vector<1x256xi1> to vector<1x256xi1>
    %182 = vector.broadcast %181 : vector<1x256xi1> to vector<16x256xi1>
    %183 = vector.broadcast %cst_73 : f32 to vector<16x256xf32>
    %184 = arith.select %182, %180, %183 : vector<16x256xi1>, vector<16x256xf32>
    %c1_74 = arith.constant 1 : index
    %c0_75 = arith.constant 0 : index
    %c0_76 = arith.constant 0 : index
    %185 = vector.load %arg7[%c1_74, %c0_75, %c0_76] : memref<9x16x1xf32, #tpu.memory_space<vmem>>, vector<1x16x1xf32>
    %186 = vector.shape_cast %185 : vector<1x16x1xf32> to vector<16x1xf32>
    %187 = vector.broadcast %186 : vector<16x1xf32> to vector<16x256xf32>
    %188 = arith.mulf %184, %187 : vector<16x256xf32>
    %189 = arith.addf %179, %188 : vector<16x256xf32>
    %c15_i32_77 = arith.constant 15 : i32
    %190 = tpu.dynamic_rotate %165 by %c15_i32_77 dim 1 : vector<16x256xf32>, i32 -> vector<16x256xf32>
    %cst_78 = arith.constant 0.000000e+00 : f32
    %191 = vector.shape_cast %14 : vector<1x256xi1> to vector<1x256xi1>
    %192 = vector.broadcast %191 : vector<1x256xi1> to vector<16x256xi1>
    %193 = vector.broadcast %cst_78 : f32 to vector<16x256xf32>
    %194 = arith.select %192, %190, %193 : vector<16x256xi1>, vector<16x256xf32>
    %c2_79 = arith.constant 2 : index
    %c0_80 = arith.constant 0 : index
    %c0_81 = arith.constant 0 : index
    %195 = vector.load %arg7[%c2_79, %c0_80, %c0_81] : memref<9x16x1xf32, #tpu.memory_space<vmem>>, vector<1x16x1xf32>
    %196 = vector.shape_cast %195 : vector<1x16x1xf32> to vector<16x1xf32>
    %197 = vector.broadcast %196 : vector<16x1xf32> to vector<16x256xf32>
    %198 = arith.mulf %194, %197 : vector<16x256xf32>
    %199 = arith.addf %189, %198 : vector<16x256xf32>
    %c1_i32_82 = arith.constant 1 : i32
    %200 = tpu.dynamic_rotate %165 by %c1_i32_82 dim 1 : vector<16x256xf32>, i32 -> vector<16x256xf32>
    %cst_83 = arith.constant 0.000000e+00 : f32
    %201 = vector.shape_cast %10 : vector<1x256xi1> to vector<1x256xi1>
    %202 = vector.broadcast %201 : vector<1x256xi1> to vector<16x256xi1>
    %203 = vector.broadcast %cst_83 : f32 to vector<16x256xf32>
    %204 = arith.select %202, %200, %203 : vector<16x256xi1>, vector<16x256xf32>
    %c3_84 = arith.constant 3 : index
    %c0_85 = arith.constant 0 : index
    %c0_86 = arith.constant 0 : index
    %205 = vector.load %arg7[%c3_84, %c0_85, %c0_86] : memref<9x16x1xf32, #tpu.memory_space<vmem>>, vector<1x16x1xf32>
    %206 = vector.shape_cast %205 : vector<1x16x1xf32> to vector<16x1xf32>
    %207 = vector.broadcast %206 : vector<16x1xf32> to vector<16x256xf32>
    %208 = arith.mulf %204, %207 : vector<16x256xf32>
    %209 = arith.addf %199, %208 : vector<16x256xf32>
    %c255_i32_87 = arith.constant 255 : i32
    %210 = tpu.dynamic_rotate %165 by %c255_i32_87 dim 1 : vector<16x256xf32>, i32 -> vector<16x256xf32>
    %cst_88 = arith.constant 0.000000e+00 : f32
    %211 = vector.shape_cast %12 : vector<1x256xi1> to vector<1x256xi1>
    %212 = vector.broadcast %211 : vector<1x256xi1> to vector<16x256xi1>
    %213 = vector.broadcast %cst_88 : f32 to vector<16x256xf32>
    %214 = arith.select %212, %210, %213 : vector<16x256xi1>, vector<16x256xf32>
    %c5_89 = arith.constant 5 : index
    %c0_90 = arith.constant 0 : index
    %c0_91 = arith.constant 0 : index
    %215 = vector.load %arg7[%c5_89, %c0_90, %c0_91] : memref<9x16x1xf32, #tpu.memory_space<vmem>>, vector<1x16x1xf32>
    %216 = vector.shape_cast %215 : vector<1x16x1xf32> to vector<16x1xf32>
    %217 = vector.broadcast %216 : vector<16x1xf32> to vector<16x256xf32>
    %218 = arith.mulf %214, %217 : vector<16x256xf32>
    %219 = arith.addf %209, %218 : vector<16x256xf32>
    %c241_i32_92 = arith.constant 241 : i32
    %220 = tpu.dynamic_rotate %165 by %c241_i32_92 dim 1 : vector<16x256xf32>, i32 -> vector<16x256xf32>
    %cst_93 = arith.constant 0.000000e+00 : f32
    %221 = vector.shape_cast %15 : vector<1x256xi1> to vector<1x256xi1>
    %222 = vector.broadcast %221 : vector<1x256xi1> to vector<16x256xi1>
    %223 = vector.broadcast %cst_93 : f32 to vector<16x256xf32>
    %224 = arith.select %222, %220, %223 : vector<16x256xi1>, vector<16x256xf32>
    %c6_94 = arith.constant 6 : index
    %c0_95 = arith.constant 0 : index
    %c0_96 = arith.constant 0 : index
    %225 = vector.load %arg7[%c6_94, %c0_95, %c0_96] : memref<9x16x1xf32, #tpu.memory_space<vmem>>, vector<1x16x1xf32>
    %226 = vector.shape_cast %225 : vector<1x16x1xf32> to vector<16x1xf32>
    %227 = vector.broadcast %226 : vector<16x1xf32> to vector<16x256xf32>
    %228 = arith.mulf %224, %227 : vector<16x256xf32>
    %229 = arith.addf %219, %228 : vector<16x256xf32>
    %c240_i32_97 = arith.constant 240 : i32
    %230 = tpu.dynamic_rotate %165 by %c240_i32_97 dim 1 : vector<16x256xf32>, i32 -> vector<16x256xf32>
    %cst_98 = arith.constant 0.000000e+00 : f32
    %231 = vector.shape_cast %8 : vector<1x256xi1> to vector<1x256xi1>
    %232 = vector.broadcast %231 : vector<1x256xi1> to vector<16x256xi1>
    %233 = vector.broadcast %cst_98 : f32 to vector<16x256xf32>
    %234 = arith.select %232, %230, %233 : vector<16x256xi1>, vector<16x256xf32>
    %c7_99 = arith.constant 7 : index
    %c0_100 = arith.constant 0 : index
    %c0_101 = arith.constant 0 : index
    %235 = vector.load %arg7[%c7_99, %c0_100, %c0_101] : memref<9x16x1xf32, #tpu.memory_space<vmem>>, vector<1x16x1xf32>
    %236 = vector.shape_cast %235 : vector<1x16x1xf32> to vector<16x1xf32>
    %237 = vector.broadcast %236 : vector<16x1xf32> to vector<16x256xf32>
    %238 = arith.mulf %234, %237 : vector<16x256xf32>
    %239 = arith.addf %229, %238 : vector<16x256xf32>
    %c239_i32_102 = arith.constant 239 : i32
    %240 = tpu.dynamic_rotate %165 by %c239_i32_102 dim 1 : vector<16x256xf32>, i32 -> vector<16x256xf32>
    %cst_103 = arith.constant 0.000000e+00 : f32
    %241 = vector.shape_cast %16 : vector<1x256xi1> to vector<1x256xi1>
    %242 = vector.broadcast %241 : vector<1x256xi1> to vector<16x256xi1>
    %243 = vector.broadcast %cst_103 : f32 to vector<16x256xf32>
    %244 = arith.select %242, %240, %243 : vector<16x256xi1>, vector<16x256xf32>
    %c8_104 = arith.constant 8 : index
    %c0_105 = arith.constant 0 : index
    %c0_106 = arith.constant 0 : index
    %245 = vector.load %arg7[%c8_104, %c0_105, %c0_106] : memref<9x16x1xf32, #tpu.memory_space<vmem>>, vector<1x16x1xf32>
    %246 = vector.shape_cast %245 : vector<1x16x1xf32> to vector<16x1xf32>
    %247 = vector.broadcast %246 : vector<16x1xf32> to vector<16x256xf32>
    %248 = arith.mulf %244, %247 : vector<16x256xf32>
    %249 = arith.addf %239, %248 : vector<16x256xf32>
    %c0_107 = arith.constant 0 : index
    %c0_108 = arith.constant 0 : index
    %250 = vector.load %arg8[%c0_107, %c0_108] : memref<16x16xf32, #tpu.memory_space<vmem>>, vector<16x16xf32>
    %cst_109 = arith.constant dense<0.000000e+00> : vector<16x256xf32>
    %251 = tpu.matmul %250, %249, %cst_109 {dimension_numbers = #tpu.dot_dimension_numbers<[1], [0], [0], [1], [0, 0, 1, 1], [], []>, precision = #tpu.contract_precision<fp32>} : vector<16x16xf32>, vector<16x256xf32>, vector<16x256xf32> -> vector<16x256xf32>
    %c0_110 = arith.constant 0 : index
    %c0_111 = arith.constant 0 : index
    %252 = vector.load %arg9[%c0_110, %c0_111] : memref<16x1xf32, #tpu.memory_space<vmem>>, vector<16x1xf32>
    %253 = vector.broadcast %252 : vector<16x1xf32> to vector<16x256xf32>
    %254 = arith.addf %251, %253 : vector<16x256xf32>
    %cst_112 = arith.constant 5.000000e-01 : f32
    %255 = vector.broadcast %cst_112 : f32 to vector<16x256xf32>
    %256 = arith.mulf %255, %254 : vector<16x256xf32>
    %257 = math.tanh %256 : vector<16x256xf32>
    %cst_113 = arith.constant 1.000000e+00 : f32
    %258 = vector.broadcast %cst_113 : f32 to vector<16x256xf32>
    %259 = arith.addf %257, %258 : vector<16x256xf32>
    %cst_114 = arith.constant 5.000000e-01 : f32
    %260 = vector.broadcast %cst_114 : f32 to vector<16x256xf32>
    %261 = arith.mulf %260, %259 : vector<16x256xf32>
    %262 = arith.mulf %254, %261 : vector<16x256xf32>
    %263 = arith.addf %262, %164 : vector<16x256xf32>
    %c0_115 = arith.constant 0 : index
    %c0_116 = arith.constant 0 : index
    %264 = vector.load %arg10[%c0_115, %c0_116] : memref<16x256xf32, #tpu.memory_space<vmem>>, vector<16x256xf32>
    tpu.vector_store %arg10[%c0_115, %c0_116], %263 {strides = array<i32>} : memref<16x256xf32, #tpu.memory_space<vmem>>, vector<16x256xf32>,
    return
  }
  func.func @transform_0(%arg0: i32) -> (i32, i32) {
    %c0_i32 = arith.constant 0 : i32
    %c0_i32_0 = arith.constant 0 : i32
    %c0_i32_1 = arith.constant 0 : i32
    return %c0_i32, %c0_i32_0 : i32, i32
  }
  func.func @transform_1(%arg0: i32) -> (i32, i32) {
    %c0_i32 = arith.constant 0 : i32
    %c0_i32_0 = arith.constant 0 : i32
    return %arg0, %c0_i32 : i32, i32
  }
  func.func @transform_2(%arg0: i32) -> (i32, i32) {
    %c0_i32 = arith.constant 0 : i32
    %c0_i32_0 = arith.constant 0 : i32
    return %arg0, %c0_i32 : i32, i32
  }
  func.func @transform_3(%arg0: i32) -> (i32, i32, i32) {
    %c0_i32 = arith.constant 0 : i32
    %c0_i32_0 = arith.constant 0 : i32
    %c0_i32_1 = arith.constant 0 : i32
    %c0_i32_2 = arith.constant 0 : i32
    return %c0_i32, %c0_i32_0, %c0_i32_1 : i32, i32, i32
  }
  func.func @transform_4(%arg0: i32) -> (i32, i32) {
    %c0_i32 = arith.constant 0 : i32
    %c0_i32_0 = arith.constant 0 : i32
    %c0_i32_1 = arith.constant 0 : i32
    return %c0_i32, %c0_i32_0 : i32, i32
  }
  func.func @transform_5(%arg0: i32) -> (i32, i32) {
    %c0_i32 = arith.constant 0 : i32
    %c0_i32_0 = arith.constant 0 : i32
    %c0_i32_1 = arith.constant 0 : i32
    return %c0_i32, %c0_i32_0 : i32, i32
  }
  func.func @transform_6(%arg0: i32) -> (i32, i32, i32) {
    %c0_i32 = arith.constant 0 : i32
    %c0_i32_0 = arith.constant 0 : i32
    %c0_i32_1 = arith.constant 0 : i32
    %c0_i32_2 = arith.constant 0 : i32
    return %c0_i32, %c0_i32_0, %c0_i32_1 : i32, i32, i32
  }
  func.func @transform_7(%arg0: i32) -> (i32, i32) {
    %c0_i32 = arith.constant 0 : i32
    %c0_i32_0 = arith.constant 0 : i32
    %c0_i32_1 = arith.constant 0 : i32
    return %c0_i32, %c0_i32_0 : i32, i32
  }
  func.func @transform_8(%arg0: i32) -> (i32, i32) {
    %c0_i32 = arith.constant 0 : i32
    %c0_i32_0 = arith.constant 0 : i32
    %c0_i32_1 = arith.constant 0 : i32
    return %c0_i32, %c0_i32_0 : i32, i32
  }
  func.func @transform_9(%arg0: i32) -> (i32, i32) {
    %c0_i32 = arith.constant 0 : i32
    %c0_i32_0 = arith.constant 0 : i32
    return %arg0, %c0_i32 : i32, i32
  }
}

</mosaic_0001>

<llo_original>
// kernel: tpu_custom_call.1
$region0: #{tpu_custom_call.1}
  #allocation0 [shape = 'u32[]', space=smem, size = 0x4, offset = 0x4, fixed_abs, tag = 'smem constant byte address 0x4 - core index']
  #allocation1 [shape = 'u32[72,128]{1,0:T(1,128)}', space=vmem, size = 0x9000, scoped, tag = 'internal scratch']
  %s0 = inlined_call_operand.vmem [shape: s32[1,256], index: 0, kind: input, shape index: {}]
  %s1 = inlined_call_operand.vmem [shape: f32[8,256], index: 1, kind: input, shape index: {}]
  %s2 = inlined_call_operand.vmem [shape: f32[8,256], index: 2, kind: input, shape index: {}]
  %s3 = inlined_call_operand.vmem [shape: f32[9,8,1], index: 3, kind: input, shape index: {}]
  %s4 = inlined_call_operand.vmem [shape: f32[16,8], index: 4, kind: input, shape index: {}]
  %s5 = inlined_call_operand.vmem [shape: f32[16,1], index: 5, kind: input, shape index: {}]
  %s6 = inlined_call_operand.vmem [shape: f32[9,16,1], index: 6, kind: input, shape index: {}]
  %s7 = inlined_call_operand.vmem [shape: f32[16,16], index: 7, kind: input, shape index: {}]
  %s8 = inlined_call_operand.vmem [shape: f32[16,1], index: 8, kind: input, shape index: {}]
  %s9 = inlined_call_operand.hbm [shape: f32[16,256], index: 9, kind: output, shape index: {}]
  %s10 = sld [smem:[#allocation0]]
  $region46: #{tpu_custom_call.1} parent=0
    _
  %s12 = ssub.s32 1, %s10
  %s13 = scalar_select 0, %s12, %s10
  $region1: #{tpu_custom_call.1} parent=0
    #allocation2 [shape = 'u8[16384]{0}', space=vmem, size = 0x4000, scoped, tag = 'output window, operand 0, single buffered']
    #allocation3 [shape = 's32[1]{0}', space=sflag, size = 0x4, scoped, tag = 'scoped memory for tpu_custom_call.1']
    %14 = vsyncpa [#allocation3], 0
    // Predicated region
    $region2: #{tpu_custom_call.1} parent=1 // pred_check
      _
    $region3: #{tpu_custom_call.1} parent=1 // pred_check_branch
      %16 = sbr.rel (0) target = $region5
    $region4: #{tpu_custom_call.1} parent=1 // pred_region
      _
    $region5: #{tpu_custom_call.1} parent=1 // pred_fallthru
      _
    // Predicated region
    $region6: #{tpu_custom_call.1} parent=1 // pred_check
      _
    $region7: #{tpu_custom_call.1} parent=1 // pred_check_branch
      %18 = sbr.rel (0) target = $region9
    $region8: #{tpu_custom_call.1} parent=1 // pred_region
      _
    $region9: #{tpu_custom_call.1} parent=1 // pred_fallthru
      _
    // Predicated region
    $region10: #{tpu_custom_call.1} parent=1 // pred_check
      _
    $region11: #{tpu_custom_call.1} parent=1 // pred_check_branch
      %20 = sbr.rel (0) target = $region13
    $region12: #{tpu_custom_call.1} parent=1 // pred_region
      _
    $region13: #{tpu_custom_call.1} parent=1 // pred_fallthru
      _
    // Predicated region
    $region14: #{tpu_custom_call.1} parent=1 // pred_check
      _
    $region15: #{tpu_custom_call.1} parent=1 // pred_check_branch
      %22 = sbr.rel (0) target = $region17
    $region16: #{tpu_custom_call.1} parent=1 // pred_region
      _
    $region17: #{tpu_custom_call.1} parent=1 // pred_fallthru
      _
    // Predicated region
    $region18: #{tpu_custom_call.1} parent=1 // pred_check
      _
    $region19: #{tpu_custom_call.1} parent=1 // pred_check_branch
      %24 = sbr.rel (0) target = $region21
    $region20: #{tpu_custom_call.1} parent=1 // pred_region
      _
    $region21: #{tpu_custom_call.1} parent=1 // pred_fallthru
      _
    // Predicated region
    $region22: #{tpu_custom_call.1} parent=1 // pred_check
      _
    $region23: #{tpu_custom_call.1} parent=1 // pred_check_branch
      %26 = sbr.rel (0) target = $region25
    $region24: #{tpu_custom_call.1} parent=1 // pred_region
      _
    $region25: #{tpu_custom_call.1} parent=1 // pred_fallthru
      _
    // Predicated region
    $region26: #{tpu_custom_call.1} parent=1 // pred_check
      _
    $region27: #{tpu_custom_call.1} parent=1 // pred_check_branch
      %28 = sbr.rel (0) target = $region29
    $region28: #{tpu_custom_call.1} parent=1 // pred_region
      _
    $region29: #{tpu_custom_call.1} parent=1 // pred_fallthru
      _
    // Predicated region
    $region30: #{tpu_custom_call.1} parent=1 // pred_check
      _
    $region31: #{tpu_custom_call.1} parent=1 // pred_check_branch
      %30 = sbr.rel (0) target = $region33
    $region32: #{tpu_custom_call.1} parent=1 // pred_region
      _
    $region33: #{tpu_custom_call.1} parent=1 // pred_fallthru
      _
    // Predicated region
    $region34: #{tpu_custom_call.1} parent=1 // pred_check
      _
    $region35: #{tpu_custom_call.1} parent=1 // pred_check_branch
      %32 = sbr.rel (0) target = $region37
    $region36: #{tpu_custom_call.1} parent=1 // pred_region
      _
    $region37: #{tpu_custom_call.1} parent=1 // pred_fallthru
      _
    %v33 = vld [vmem:[%s1] sm:$0xff]
    %v34 = vld [vmem:[%s1 + $0x8] sm:$0xff]
    %v35 = vld [vmem:[%s2] sm:$0xff]
    %v36 = vld [vmem:[%s2 + $0x8] sm:$0xff]
    %v37 = vadd.f32 %v33, %v35
    %v38 = vadd.f32 %v34, %v36
    %v39 = vlaneseq
    %v40 = vand.u32 %v39, 127
    %v41 = vadd.s32 %v40, 128
    %v42 = vld [vmem:[%s0] sm:$0x3]
    %vm43 = vcmp.ge.s32.totalorder %v40, 16
    %vm44 = vcmp.ge.s32.totalorder %v41, 16
    %vm45 = vcmp.lt.s32.totalorder %v40, 240
    %vm46 = vcmp.lt.s32.totalorder %v41, 240
    %vm47 = vcmp.ge.s32.totalorder %v42, 1
    %vm48 = vcmp.le.s32.totalorder %v42, 14
    %v49 = vsel %vm47, 1, 0
    %v50 = vperm.slane %v49, 0
    %v51 = vperm.slane %v49, 1
    %vm52 = vcmp.ne.s32.totalorder %v50, 0
    %vm53 = vcmp.ne.s32.totalorder %v51, 0
    %vm54 = vmand %vm43, %vm52
    %vm55 = vmand %vm44, %vm53
    %v56 = vsel %vm48, 1, 0
    %v57 = vperm.slane %v56, 0
    %v58 = vperm.slane %v56, 1
    %vm59 = vcmp.ne.s32.totalorder %v57, 0
    %vm60 = vcmp.ne.s32.totalorder %v58, 0
    %vm61 = vmand %vm43, %vm59
    %vm62 = vmand %vm44, %vm60
    %vm63 = vmand %vm45, %vm52
    %vm64 = vmand %vm46, %vm53
    %vm65 = vmand %vm45, %vm59
    %vm66 = vmand %vm46, %vm60
    %v67 = vld [vmem:[%s1] sm:$0xf]
    %v68 = vld [vmem:[%s1 + $0x8] sm:$0xf]
    %v69 = vld [vmem:[%s2] sm:$0xf]
    %v70 = vld [vmem:[%s2 + $0x8] sm:$0xf]
    %v71 = vmul.f32 %v67, %v69
    %v72 = vmul.f32 %v68, %v70
    %vm73 = vcmask 1043456
    %v74 = vsel %vm73, %v71, 0.0
    %v75 = vrot.slane %v74, 4
    %v76 = vadd.f32 %v74, %v75
    %v77 = vrot.slane %v76, 2
    %v78 = vadd.f32 %v76, %v77
    %v79 = vrot.slane %v78, 1
    %v80 = vadd.f32 %v78, %v79
    %v81 = vsel %vm73, %v72, 0.0
    %v82 = vrot.slane %v81, 4
    %v83 = vadd.f32 %v81, %v82
    %v84 = vrot.slane %v83, 2
    %v85 = vadd.f32 %v83, %v84
    %v86 = vrot.slane %v85, 1
    %v87 = vadd.f32 %v85, %v86
    %v88 = vmul.f32 %v67, %v67
    %v89 = vmul.f32 %v68, %v68
    %v90 = vsel %vm73, %v88, 0.0
    %v91 = vrot.slane %v90, 4
    %v92 = vadd.f32 %v90, %v91
    %v93 = vrot.slane %v92, 2
    %v94 = vadd.f32 %v92, %v93
    %v95 = vrot.slane %v94, 1
    %v96 = vadd.f32 %v94, %v95
    %v97 = vsel %vm73, %v89, 0.0
    %v98 = vrot.slane %v97, 4
    %v99 = vadd.f32 %v97, %v98
    %v100 = vrot.slane %v99, 2
    %v101 = vadd.f32 %v99, %v100
    %v102 = vrot.slane %v101, 1
    %v103 = vadd.f32 %v101, %v102
    %v104 = vmul.f32 %v69, %v69
    %v105 = vmul.f32 %v70, %v70
    %v106 = vsel %vm73, %v104, 0.0
    %v107 = vrot.slane %v106, 4
    %v108 = vadd.f32 %v106, %v107
    %v109 = vrot.slane %v108, 2
    %v110 = vadd.f32 %v108, %v109
    %v111 = vrot.slane %v110, 1
    %v112 = vadd.f32 %v110, %v111
    %v113 = vsel %vm73, %v105, 0.0
    %v114 = vrot.slane %v113, 4
    %v115 = vadd.f32 %v113, %v114
    %v116 = vrot.slane %v115, 2
    %v117 = vadd.f32 %v115, %v116
    %v118 = vrot.slane %v117, 1
    %v119 = vadd.f32 %v117, %v118
    %v120 = vmul.f32 %v96, %v112
    %v121 = vmul.f32 %v103, %v119
    %v122 = vmax.f32 %v120, 1e-16
    %v123 = vmax.f32 %v121, 1e-16
    %v124 = vrsqrt.pop %v122
    %v125 = vmul.f32 %v124, %v122
    %v126 = vmul.f32 %v125, %v124
    %v127 = vmul.f32 0.5, %v126
    %v128 = vsub.f32 1.5, %v127
    %v129 = vmul.f32 %v124, %v128
    %vm130 = vweird.f32 %v122
    %vm131 = vweird.f32 %v124
    %vm132 = vmor %vm130, %vm131
    %v133 = vsel %vm132, %v124, %v129
    %v134 = vrsqrt.pop %v123
    %v135 = vmul.f32 %v134, %v123
    %v136 = vmul.f32 %v135, %v134
    %v137 = vmul.f32 0.5, %v136
    %v138 = vsub.f32 1.5, %v137
    %v139 = vmul.f32 %v134, %v138
    %vm140 = vweird.f32 %v123
    %vm141 = vweird.f32 %v134
    %vm142 = vmor %vm140, %vm141
    %v143 = vsel %vm142, %v134, %v139
    %v144 = vmul.f32 %v80, %v133
    %v145 = vmul.f32 %v87, %v143
    %v146 = vmul.f32 %v144, 0.5
    %v147 = vmul.f32 %v145, 0.5
    %v148 = vtanh.pop %v146
    %v149 = vtanh.pop %v147
    %v150 = vadd.f32 %v148, 1.0
    %v151 = vadd.f32 %v149, 1.0
    %v152 = vmul.f32 %v150, 0.5
    %v153 = vmul.f32 %v151, 0.5
    %v154 = vld [vmem:[%s1] sm:$0xf0]
    %v155 = vld [vmem:[%s1 + $0x8] sm:$0xf0]
    %v156 = vld [vmem:[%s2] sm:$0xf0]
    %v157 = vld [vmem:[%s2 + $0x8] sm:$0xf0]
    %v158 = vmul.f32 %v154, %v156
    %v159 = vmul.f32 %v155, %v157
    %v162 = vrot.slane %v158, 4
    %v163 = vrot.slane %v159, 4
    %v166 = vsel %vm73, %v162, 0.0
    %v167 = vrot.slane %v166, 4
    %v168 = vadd.f32 %v166, %v167
    %v169 = vrot.slane %v168, 2
    %v170 = vadd.f32 %v168, %v169
    %v171 = vrot.slane %v170, 1
    %v172 = vadd.f32 %v170, %v171
    %v173 = vsel %vm73, %v163, 0.0
    %v174 = vrot.slane %v173, 4
    %v175 = vadd.f32 %v173, %v174
    %v176 = vrot.slane %v175, 2
    %v177 = vadd.f32 %v175, %v176
    %v178 = vrot.slane %v177, 1
    %v179 = vadd.f32 %v177, %v178
    %v180 = vmul.f32 %v154, %v154
    %v181 = vmul.f32 %v155, %v155
    %v184 = vrot.slane %v180, 4
    %v185 = vrot.slane %v181, 4
    %v188 = vsel %vm73, %v184, 0.0
    %v189 = vrot.slane %v188, 4
    %v190 = vadd.f32 %v188, %v189
    %v191 = vrot.slane %v190, 2
    %v192 = vadd.f32 %v190, %v191
    %v193 = vrot.slane %v192, 1
    %v194 = vadd.f32 %v192, %v193
    %v195 = vsel %vm73, %v185, 0.0
    %v196 = vrot.slane %v195, 4
    %v197 = vadd.f32 %v195, %v196
    %v198 = vrot.slane %v197, 2
    %v199 = vadd.f32 %v197, %v198
    %v200 = vrot.slane %v199, 1
    %v201 = vadd.f32 %v199, %v200
    %v202 = vmul.f32 %v156, %v156
    %v203 = vmul.f32 %v157, %v157
    %v206 = vrot.slane %v202, 4
    %v207 = vrot.slane %v203, 4
    %v210 = vsel %vm73, %v206, 0.0
    %v211 = vrot.slane %v210, 4
    %v212 = vadd.f32 %v210, %v211
    %v213 = vrot.slane %v212, 2
    %v214 = vadd.f32 %v212, %v213
    %v215 = vrot.slane %v214, 1
    %v216 = vadd.f32 %v214, %v215
    %v217 = vsel %vm73, %v207, 0.0
    %v218 = vrot.slane %v217, 4
    %v219 = vadd.f32 %v217, %v218
    %v220 = vrot.slane %v219, 2
    %v221 = vadd.f32 %v219, %v220
    %v222 = vrot.slane %v221, 1
    %v223 = vadd.f32 %v221, %v222
    %v224 = vmul.f32 %v194, %v216
    %v225 = vmul.f32 %v201, %v223
    %v226 = vmax.f32 %v224, 1e-16
    %v227 = vmax.f32 %v225, 1e-16
    %v228 = vrsqrt.pop %v226
    %v229 = vmul.f32 %v228, %v226
    %v230 = vmul.f32 %v229, %v228
    %v231 = vmul.f32 0.5, %v230
    %v232 = vsub.f32 1.5, %v231
    %v233 = vmul.f32 %v228, %v232
    %vm234 = vweird.f32 %v226
    %vm235 = vweird.f32 %v228
    %vm236 = vmor %vm234, %vm235
    %v237 = vsel %vm236, %v228, %v233
    %v238 = vrsqrt.pop %v227
    %v239 = vmul.f32 %v238, %v227
    %v240 = vmul.f32 %v239, %v238
    %v241 = vmul.f32 0.5, %v240
    %v242 = vsub.f32 1.5, %v241
    %v243 = vmul.f32 %v238, %v242
    %vm244 = vweird.f32 %v227
    %vm245 = vweird.f32 %v238
    %vm246 = vmor %vm244, %vm245
    %v247 = vsel %vm246, %v238, %v243
    %v248 = vmul.f32 %v172, %v237
    %v249 = vmul.f32 %v179, %v247
    %v250 = vmul.f32 %v248, 0.5
    %v251 = vmul.f32 %v249, 0.5
    %v252 = vtanh.pop %v250
    %v253 = vtanh.pop %v251
    %v254 = vadd.f32 %v252, 1.0
    %v255 = vadd.f32 %v253, 1.0
    %v256 = vmul.f32 %v254, 0.5
    %v257 = vmul.f32 %v255, 0.5
    %s258 = scalar_lea.vmem %s3, 32
    %v259 = vld [vmem:[%s258] sm:$0xff]
    %261 = vset.pattern.permute.xlu0 0
    %262 = vperm.xlu0 %261, %v259
    %v263 = vpop.permute.xlu0 %262
    %v265 = vmul.f32 %v37, %v263
    %v266 = vmul.f32 %v38, %v263
    %267 = vrot.lane.b32.xlu0 %v37, 17
    %v268 = vpop.permute.xlu0 %267
    %269 = vrot.lane.b32.xlu0 %v38, 17
    %v270 = vpop.permute.xlu0 %269
    %vm271 = vcmp.lt.s32.totalorder %v40, 17
    %v272 = vsel %vm271, %v268, %v270
    %v273 = vsel %vm271, %v270, %v268
    %v274 = vsel %vm54, 1, 0
    %v275 = vsel %vm55, 1, 0
    %v276 = vperm.slane %v274, 0
    %v277 = vperm.slane %v275, 0
    %vm278 = vcmp.eq.s32.totalorder %v276, 1
    %vm279 = vcmp.eq.s32.totalorder %v277, 1
    %v280 = vsel %vm278, %v273, 0.0
    %v281 = vsel %vm279, %v272, 0.0
    %v282 = vld [vmem:[%s3] sm:$0xff]
    %284 = vset.pattern.permute.xlu0 0
    %285 = vperm.xlu0 %284, %v282
    %v286 = vpop.permute.xlu0 %285
    %v288 = vmul.f32 %v280, %v286
    %v289 = vmul.f32 %v281, %v286
    %v290 = vadd.f32 %v265, %v288
    %v291 = vadd.f32 %v266, %v289
    %292 = vrot.lane.b32.xlu0 %v37, 16
    %v293 = vpop.permute.xlu0 %292
    %294 = vrot.lane.b32.xlu0 %v38, 16
    %v295 = vpop.permute.xlu0 %294
    %vm296 = vcmp.lt.s32.totalorder %v40, 16
    %v297 = vsel %vm296, %v293, %v295
    %v298 = vsel %vm296, %v295, %v293
    %v299 = vsel %vm43, 1, 0
    %v300 = vsel %vm44, 1, 0
    %vm301 = vcmp.eq.s32.totalorder %v299, 1
    %vm302 = vcmp.eq.s32.totalorder %v300, 1
    %v303 = vsel %vm301, %v298, 0.0
    %v304 = vsel %vm302, %v297, 0.0
    %s305 = scalar_lea.vmem %s3, 8
    %v306 = vld [vmem:[%s305] sm:$0xff]
    %308 = vset.pattern.permute.xlu0 0
    %309 = vperm.xlu0 %308, %v306
    %v310 = vpop.permute.xlu0 %309
    %v312 = vmul.f32 %v303, %v310
    %v313 = vmul.f32 %v304, %v310
    %v314 = vadd.f32 %v290, %v312
    %v315 = vadd.f32 %v291, %v313
    %316 = vrot.lane.b32.xlu0 %v37, 15
    %v317 = vpop.permute.xlu0 %316
    %318 = vrot.lane.b32.xlu0 %v38, 15
    %v319 = vpop.permute.xlu0 %318
    %vm320 = vcmp.lt.s32.totalorder %v40, 15
    %v321 = vsel %vm320, %v317, %v319
    %v322 = vsel %vm320, %v319, %v317
    %v323 = vsel %vm61, 1, 0
    %v324 = vsel %vm62, 1, 0
    %v325 = vperm.slane %v323, 0
    %v326 = vperm.slane %v324, 0
    %vm327 = vcmp.eq.s32.totalorder %v325, 1
    %vm328 = vcmp.eq.s32.totalorder %v326, 1
    %v329 = vsel %vm327, %v322, 0.0
    %v330 = vsel %vm328, %v321, 0.0
    %s331 = scalar_lea.vmem %s3, 16
    %v332 = vld [vmem:[%s331] sm:$0xff]
    %334 = vset.pattern.permute.xlu0 0
    %335 = vperm.xlu0 %334, %v332
    %v336 = vpop.permute.xlu0 %335
    %v338 = vmul.f32 %v329, %v336
    %v339 = vmul.f32 %v330, %v336
    %v340 = vadd.f32 %v314, %v338
    %v341 = vadd.f32 %v315, %v339
    %342 = vrot.lane.b32.xlu0 %v37, 1
    %v343 = vpop.permute.xlu0 %342
    %344 = vrot.lane.b32.xlu0 %v38, 1
    %v345 = vpop.permute.xlu0 %344
    %vm346 = vcmp.lt.s32.totalorder %v40, 1
    %v347 = vsel %vm346, %v343, %v345
    %v348 = vsel %vm346, %v345, %v343
    %vm349 = vcmp.eq.s32.totalorder %v50, 1
    %vm350 = vcmp.eq.s32.totalorder %v51, 1
    %v351 = vsel %vm349, %v348, 0.0
    %v352 = vsel %vm350, %v347, 0.0
    %s353 = scalar_lea.vmem %s3, 24
    %v354 = vld [vmem:[%s353] sm:$0xff]
    %356 = vset.pattern.permute.xlu0 0
    %357 = vperm.xlu0 %356, %v354
    %v358 = vpop.permute.xlu0 %357
    %v360 = vmul.f32 %v351, %v358
    %v361 = vmul.f32 %v352, %v358
    %v362 = vadd.f32 %v340, %v360
    %v363 = vadd.f32 %v341, %v361
    %364 = vrot.lane.b32.xlu0 %v37, 127
    %v365 = vpop.permute.xlu0 %364
    %366 = vrot.lane.b32.xlu0 %v38, 127
    %v367 = vpop.permute.xlu0 %366
    %vm368 = vcmp.lt.s32.totalorder %v40, 127
    %v369 = vsel %vm368, %v365, %v367
    %v370 = vsel %vm368, %v367, %v365
    %vm371 = vcmp.eq.s32.totalorder %v57, 1
    %vm372 = vcmp.eq.s32.totalorder %v58, 1
    %v373 = vsel %vm371, %v369, 0.0
    %v374 = vsel %vm372, %v370, 0.0
    %s375 = scalar_lea.vmem %s3, 40
    %v376 = vld [vmem:[%s375] sm:$0xff]
    %378 = vset.pattern.permute.xlu0 0
    %379 = vperm.xlu0 %378, %v376
    %v380 = vpop.permute.xlu0 %379
    %v382 = vmul.f32 %v373, %v380
    %v383 = vmul.f32 %v374, %v380
    %v384 = vadd.f32 %v362, %v382
    %v385 = vadd.f32 %v363, %v383
    %386 = vrot.lane.b32.xlu0 %v37, 113
    %v387 = vpop.permute.xlu0 %386
    %388 = vrot.lane.b32.xlu0 %v38, 113
    %v389 = vpop.permute.xlu0 %388
    %vm390 = vcmp.lt.s32.totalorder %v40, 113
    %v391 = vsel %vm390, %v387, %v389
    %v392 = vsel %vm390, %v389, %v387
    %v393 = vsel %vm63, 1, 0
    %v394 = vsel %vm64, 1, 0
    %v395 = vperm.slane %v393, 0
    %v396 = vperm.slane %v394, 0
    %vm397 = vcmp.eq.s32.totalorder %v395, 1
    %vm398 = vcmp.eq.s32.totalorder %v396, 1
    %v399 = vsel %vm397, %v391, 0.0
    %v400 = vsel %vm398, %v392, 0.0
    %s401 = scalar_lea.vmem %s3, 48
    %v402 = vld [vmem:[%s401] sm:$0xff]
    %404 = vset.pattern.permute.xlu0 0
    %405 = vperm.xlu0 %404, %v402
    %v406 = vpop.permute.xlu0 %405
    %v408 = vmul.f32 %v399, %v406
    %v409 = vmul.f32 %v400, %v406
    %v410 = vadd.f32 %v384, %v408
    %v411 = vadd.f32 %v385, %v409
    %412 = vrot.lane.b32.xlu0 %v37, 112
    %v413 = vpop.permute.xlu0 %412
    %414 = vrot.lane.b32.xlu0 %v38, 112
    %v415 = vpop.permute.xlu0 %414
    %vm416 = vcmp.lt.s32.totalorder %v40, 112
    %v417 = vsel %vm416, %v413, %v415
    %v418 = vsel %vm416, %v415, %v413
    %v419 = vsel %vm45, 1, 0
    %v420 = vsel %vm46, 1, 0
    %vm421 = vcmp.eq.s32.totalorder %v419, 1
    %vm422 = vcmp.eq.s32.totalorder %v420, 1
    %v423 = vsel %vm421, %v417, 0.0
    %v424 = vsel %vm422, %v418, 0.0
    %s425 = scalar_lea.vmem %s3, 56
    %v426 = vld [vmem:[%s425] sm:$0xff]
    %428 = vset.pattern.permute.xlu0 0
    %429 = vperm.xlu0 %428, %v426
    %v430 = vpop.permute.xlu0 %429
    %v432 = vmul.f32 %v423, %v430
    %v433 = vmul.f32 %v424, %v430
    %v434 = vadd.f32 %v410, %v432
    %v435 = vadd.f32 %v411, %v433
    %436 = vrot.lane.b32.xlu0 %v37, 111
    %v437 = vpop.permute.xlu0 %436
    %438 = vrot.lane.b32.xlu0 %v38, 111
    %v439 = vpop.permute.xlu0 %438
    %vm440 = vcmp.lt.s32.totalorder %v40, 111
    %v441 = vsel %vm440, %v437, %v439
    %v442 = vsel %vm440, %v439, %v437
    %v443 = vsel %vm65, 1, 0
    %v444 = vsel %vm66, 1, 0
    %v445 = vperm.slane %v443, 0
    %v446 = vperm.slane %v444, 0
    %vm447 = vcmp.eq.s32.totalorder %v445, 1
    %vm448 = vcmp.eq.s32.totalorder %v446, 1
    %v449 = vsel %vm447, %v441, 0.0
    %v450 = vsel %vm448, %v442, 0.0
    %s451 = scalar_lea.vmem %s3, 64
    %v452 = vld [vmem:[%s451] sm:$0xff]
    %454 = vset.pattern.permute.xlu0 0
    %455 = vperm.xlu0 %454, %v452
    %v456 = vpop.permute.xlu0 %455
    %v458 = vmul.f32 %v449, %v456
    %v459 = vmul.f32 %v450, %v456
    %v460 = vadd.f32 %v434, %v458
    %v461 = vadd.f32 %v435, %v459
    %v462 = vld [vmem:[%s4] sm:$0xff]
    %v463 = vld [vmem:[%s4 + $0x8] sm:$0xff]
    %v464 = vld [vmem:[%s5] sm:$0xff]
    %v465 = vld [vmem:[%s5 + $0x8] sm:$0xff]
    %467 = vset.pattern.permute.xlu0 0
    %468 = vperm.xlu0 %467, %v464
    %v469 = vpop.permute.xlu0 %468
    %472 = vset.pattern.permute.xlu0 0
    %473 = vperm.xlu0 %472, %v465
    %v474 = vpop.permute.xlu0 %473
    %vm476 = vcmask 64512
    %v478 = vsel %vm476, %v462, 0
    %v481 = vsel %vm476, %v463, 0
    %483 = vmatpush.msra.mxu0 0.0
    %484 = vmatpush.msra.mxu0 0.0
    %485 = vmatpush.msra.mxu0 0.0
    %486 = vmatpush.msra.mxu0 0.0
    %487 = vmatpush.msra.mxu0 0.0
    %488 = vmatpush.msra.mxu0 0.0
    %489 = vmatpush.msra.mxu0 0.0
    %490 = vmatpush.msra.mxu0 0.0
    %491 = vmatpush.msra.mxu0 0.0
    %492 = vmatpush.msra.mxu0 0.0
    %493 = vmatpush.msra.mxu0 0.0
    %494 = vmatpush.msra.mxu0 0.0
    %495 = vmatpush.msra.mxu0 0.0
    %496 = vmatpush.msra.mxu0 0.0
    %497 = vmatpush.msra.mxu0 0.0
    %v498 = vand.u32 %v460, 4294901760
    %499 = vmatpush.msra.mxu0 %v498
    %v500 = vand.u32 %v478, 4294901760
    %v501 = vsub.f32 %v478, %v500
    %v502 = vand.u32 %v501, 4294901760
    %v503 = vsub.f32 %v501, %v502
    %v504 = vand.u32 %v503, 4294901760
    %505 = vmatmul.f32.gmra.mxu0 %v504
    %v506 = vpop.f32.mrf.mxu0
    %v507 = vadd.f32 %v469, %v506
    %v508 = vand.u32 %v481, 4294901760
    %v509 = vsub.f32 %v481, %v508
    %v510 = vand.u32 %v509, 4294901760
    %v511 = vsub.f32 %v509, %v510
    %v512 = vand.u32 %v511, 4294901760
    %513 = vmatmul.f32.gmra.mxu0 %v512
    %v514 = vpop.f32.mrf.mxu0
    %v515 = vadd.f32 %v474, %v514
    %516 = vdwg.mxu0
    %517 = vmatpush.msra.mxu0 0.0
    %518 = vmatpush.msra.mxu0 0.0
    %519 = vmatpush.msra.mxu0 0.0
    %520 = vmatpush.msra.mxu0 0.0
    %521 = vmatpush.msra.mxu0 0.0
    %522 = vmatpush.msra.mxu0 0.0
    %523 = vmatpush.msra.mxu0 0.0
    %524 = vmatpush.msra.mxu0 0.0
    %525 = vmatpush.msra.mxu0 0.0
    %526 = vmatpush.msra.mxu0 0.0
    %527 = vmatpush.msra.mxu0 0.0
    %528 = vmatpush.msra.mxu0 0.0
    %529 = vmatpush.msra.mxu0 0.0
    %530 = vmatpush.msra.mxu0 0.0
    %531 = vmatpush.msra.mxu0 0.0
    %v532 = vand.u32 %v460, 4294901760
    %v533 = vsub.f32 %v460, %v532
    %v534 = vand.u32 %v533, 4294901760
    %v535 = vsub.f32 %v533, %v534
    %v536 = vand.u32 %v535, 4294901760
    %537 = vmatpush.msra.mxu0 %v536
    %v538 = vand.u32 %v478, 4294901760
    %539 = vmatmul.f32.gmra.mxu0 %v538
    %v540 = vpop.f32.mrf.mxu0
    %v541 = vadd.f32 %v507, %v540
    %v542 = vand.u32 %v481, 4294901760
    %543 = vmatmul.f32.gmra.mxu0 %v542
    %v544 = vpop.f32.mrf.mxu0
    %v545 = vadd.f32 %v515, %v544
    %546 = vdwg.mxu0
    %547 = vmatpush.msra.mxu0 0.0
    %548 = vmatpush.msra.mxu0 0.0
    %549 = vmatpush.msra.mxu0 0.0
    %550 = vmatpush.msra.mxu0 0.0
    %551 = vmatpush.msra.mxu0 0.0
    %552 = vmatpush.msra.mxu0 0.0
    %553 = vmatpush.msra.mxu0 0.0
    %554 = vmatpush.msra.mxu0 0.0
    %555 = vmatpush.msra.mxu0 0.0
    %556 = vmatpush.msra.mxu0 0.0
    %557 = vmatpush.msra.mxu0 0.0
    %558 = vmatpush.msra.mxu0 0.0
    %559 = vmatpush.msra.mxu0 0.0
    %560 = vmatpush.msra.mxu0 0.0
    %561 = vmatpush.msra.mxu0 0.0
    %v562 = vand.u32 %v460, 4294901760
    %v563 = vsub.f32 %v460, %v562
    %564 = vmatpush.msra.mxu0 %v563
    %v565 = vand.u32 %v478, 4294901760
    %v566 = vsub.f32 %v478, %v565
    %567 = vmatmul.f32.gmra.mxu0 %v566
    %v568 = vpop.f32.mrf.mxu0
    %v569 = vadd.f32 %v541, %v568
    %v570 = vand.u32 %v481, 4294901760
    %v571 = vsub.f32 %v481, %v570
    %572 = vmatmul.f32.gmra.mxu0 %v571
    %v573 = vpop.f32.mrf.mxu0
    %v574 = vadd.f32 %v545, %v573
    %575 = vdwg.mxu0
    %576 = vmatpush.msra.mxu0 0.0
    %577 = vmatpush.msra.mxu0 0.0
    %578 = vmatpush.msra.mxu0 0.0
    %579 = vmatpush.msra.mxu0 0.0
    %580 = vmatpush.msra.mxu0 0.0
    %581 = vmatpush.msra.mxu0 0.0
    %582 = vmatpush.msra.mxu0 0.0
    %583 = vmatpush.msra.mxu0 0.0
    %584 = vmatpush.msra.mxu0 0.0
    %585 = vmatpush.msra.mxu0 0.0
    %586 = vmatpush.msra.mxu0 0.0
    %587 = vmatpush.msra.mxu0 0.0
    %588 = vmatpush.msra.mxu0 0.0
    %589 = vmatpush.msra.mxu0 0.0
    %590 = vmatpush.msra.mxu0 0.0
    %v591 = vand.u32 %v460, 4294901760
    %592 = vmatpush.msra.mxu0 %v591
    %v593 = vand.u32 %v478, 4294901760
    %v594 = vsub.f32 %v478, %v593
    %v595 = vand.u32 %v594, 4294901760
    %596 = vmatmul.f32.gmra.mxu0 %v595
    %v597 = vpop.f32.mrf.mxu0
    %v598 = vadd.f32 %v569, %v597
    %v599 = vand.u32 %v481, 4294901760
    %v600 = vsub.f32 %v481, %v599
    %v601 = vand.u32 %v600, 4294901760
    %602 = vmatmul.f32.gmra.mxu0 %v601
    %v603 = vpop.f32.mrf.mxu0
    %v604 = vadd.f32 %v574, %v603
    %605 = vdwg.mxu0
    %606 = vmatpush.msra.mxu0 0.0
    %607 = vmatpush.msra.mxu0 0.0
    %608 = vmatpush.msra.mxu0 0.0
    %609 = vmatpush.msra.mxu0 0.0
    %610 = vmatpush.msra.mxu0 0.0
    %611 = vmatpush.msra.mxu0 0.0
    %612 = vmatpush.msra.mxu0 0.0
    %613 = vmatpush.msra.mxu0 0.0
    %614 = vmatpush.msra.mxu0 0.0
    %615 = vmatpush.msra.mxu0 0.0
    %616 = vmatpush.msra.mxu0 0.0
    %617 = vmatpush.msra.mxu0 0.0
    %618 = vmatpush.msra.mxu0 0.0
    %619 = vmatpush.msra.mxu0 0.0
    %620 = vmatpush.msra.mxu0 0.0
    %v621 = vand.u32 %v460, 4294901760
    %v622 = vsub.f32 %v460, %v621
    %v623 = vand.u32 %v622, 4294901760
    %624 = vmatpush.msra.mxu0 %v623
    %v625 = vand.u32 %v478, 4294901760
    %626 = vmatmul.f32.gmra.mxu0 %v625
    %v627 = vpop.f32.mrf.mxu0
    %v628 = vadd.f32 %v598, %v627
    %v629 = vand.u32 %v481, 4294901760
    %630 = vmatmul.f32.gmra.mxu0 %v629
    %v631 = vpop.f32.mrf.mxu0
    %v632 = vadd.f32 %v604, %v631
    %633 = vdwg.mxu0
    %634 = vmatpush.msra.mxu0 0.0
    %635 = vmatpush.msra.mxu0 0.0
    %636 = vmatpush.msra.mxu0 0.0
    %637 = vmatpush.msra.mxu0 0.0
    %638 = vmatpush.msra.mxu0 0.0
    %639 = vmatpush.msra.mxu0 0.0
    %640 = vmatpush.msra.mxu0 0.0
    %641 = vmatpush.msra.mxu0 0.0
    %642 = vmatpush.msra.mxu0 0.0
    %643 = vmatpush.msra.mxu0 0.0
    %644 = vmatpush.msra.mxu0 0.0
    %645 = vmatpush.msra.mxu0 0.0
    %646 = vmatpush.msra.mxu0 0.0
    %647 = vmatpush.msra.mxu0 0.0
    %648 = vmatpush.msra.mxu0 0.0
    %v649 = vand.u32 %v460, 4294901760
    %650 = vmatpush.msra.mxu0 %v649
    %v651 = vand.u32 %v478, 4294901760
    %652 = vmatmul.f32.gmra.mxu0 %v651
    %v653 = vpop.f32.mrf.mxu0
    %v654 = vadd.f32 %v628, %v653
    %v655 = vand.u32 %v481, 4294901760
    %656 = vmatmul.f32.gmra.mxu0 %v655
    %v657 = vpop.f32.mrf.mxu0
    %v658 = vadd.f32 %v632, %v657
    %659 = vdwg.mxu0
    %660 = vmatpush.msra.mxu0 0.0
    %661 = vmatpush.msra.mxu0 0.0
    %662 = vmatpush.msra.mxu0 0.0
    %663 = vmatpush.msra.mxu0 0.0
    %664 = vmatpush.msra.mxu0 0.0
    %665 = vmatpush.msra.mxu0 0.0
    %666 = vmatpush.msra.mxu0 0.0
    %667 = vmatpush.msra.mxu0 0.0
    %668 = vmatpush.msra.mxu0 0.0
    %669 = vmatpush.msra.mxu0 0.0
    %670 = vmatpush.msra.mxu0 0.0
    %671 = vmatpush.msra.mxu0 0.0
    %672 = vmatpush.msra.mxu0 0.0
    %673 = vmatpush.msra.mxu0 0.0
    %674 = vmatpush.msra.mxu0 0.0
    %v675 = vand.u32 %v461, 4294901760
    %676 = vmatpush.msra.mxu0 %v675
    %v677 = vand.u32 %v478, 4294901760
    %v678 = vsub.f32 %v478, %v677
    %v679 = vand.u32 %v678, 4294901760
    %v680 = vsub.f32 %v678, %v679
    %v681 = vand.u32 %v680, 4294901760
    %682 = vmatmul.f32.gmra.mxu0 %v681
    %v683 = vpop.f32.mrf.mxu0
    %v684 = vadd.f32 %v469, %v683
    %v685 = vand.u32 %v481, 4294901760
    %v686 = vsub.f32 %v481, %v685
    %v687 = vand.u32 %v686, 4294901760
    %v688 = vsub.f32 %v686, %v687
    %v689 = vand.u32 %v688, 4294901760
    %690 = vmatmul.f32.gmra.mxu0 %v689
    %v691 = vpop.f32.mrf.mxu0
    %v692 = vadd.f32 %v474, %v691
    %693 = vdwg.mxu0
    %694 = vmatpush.msra.mxu0 0.0
    %695 = vmatpush.msra.mxu0 0.0
    %696 = vmatpush.msra.mxu0 0.0
    %697 = vmatpush.msra.mxu0 0.0
    %698 = vmatpush.msra.mxu0 0.0
    %699 = vmatpush.msra.mxu0 0.0
    %700 = vmatpush.msra.mxu0 0.0
    %701 = vmatpush.msra.mxu0 0.0
    %702 = vmatpush.msra.mxu0 0.0
    %703 = vmatpush.msra.mxu0 0.0
    %704 = vmatpush.msra.mxu0 0.0
    %705 = vmatpush.msra.mxu0 0.0
    %706 = vmatpush.msra.mxu0 0.0
    %707 = vmatpush.msra.mxu0 0.0
    %708 = vmatpush.msra.mxu0 0.0
    %v709 = vand.u32 %v461, 4294901760
    %v710 = vsub.f32 %v461, %v709
    %v711 = vand.u32 %v710, 4294901760
    %v712 = vsub.f32 %v710, %v711
    %v713 = vand.u32 %v712, 4294901760
    %714 = vmatpush.msra.mxu0 %v713
    %v715 = vand.u32 %v478, 4294901760
    %716 = vmatmul.f32.gmra.mxu0 %v715
    %v717 = vpop.f32.mrf.mxu0
    %v718 = vadd.f32 %v684, %v717
    %v719 = vand.u32 %v481, 4294901760
    %720 = vmatmul.f32.gmra.mxu0 %v719
    %v721 = vpop.f32.mrf.mxu0
    %v722 = vadd.f32 %v692, %v721
    %723 = vdwg.mxu0
    %724 = vmatpush.msra.mxu0 0.0
    %725 = vmatpush.msra.mxu0 0.0
    %726 = vmatpush.msra.mxu0 0.0
    %727 = vmatpush.msra.mxu0 0.0
    %728 = vmatpush.msra.mxu0 0.0
    %729 = vmatpush.msra.mxu0 0.0
    %730 = vmatpush.msra.mxu0 0.0
    %731 = vmatpush.msra.mxu0 0.0
    %732 = vmatpush.msra.mxu0 0.0
    %733 = vmatpush.msra.mxu0 0.0
    %734 = vmatpush.msra.mxu0 0.0
    %735 = vmatpush.msra.mxu0 0.0
    %736 = vmatpush.msra.mxu0 0.0
    %737 = vmatpush.msra.mxu0 0.0
    %738 = vmatpush.msra.mxu0 0.0
    %v739 = vand.u32 %v461, 4294901760
    %v740 = vsub.f32 %v461, %v739
    %741 = vmatpush.msra.mxu0 %v740
    %v742 = vand.u32 %v478, 4294901760
    %v743 = vsub.f32 %v478, %v742
    %744 = vmatmul.f32.gmra.mxu0 %v743
    %v745 = vpop.f32.mrf.mxu0
    %v746 = vadd.f32 %v718, %v745
    %v747 = vand.u32 %v481, 4294901760
    %v748 = vsub.f32 %v481, %v747
    %749 = vmatmul.f32.gmra.mxu0 %v748
    %v750 = vpop.f32.mrf.mxu0
    %v751 = vadd.f32 %v722, %v750
    %752 = vdwg.mxu0
    %753 = vmatpush.msra.mxu0 0.0
    %754 = vmatpush.msra.mxu0 0.0
    %755 = vmatpush.msra.mxu0 0.0
    %756 = vmatpush.msra.mxu0 0.0
    %757 = vmatpush.msra.mxu0 0.0
    %758 = vmatpush.msra.mxu0 0.0
    %759 = vmatpush.msra.mxu0 0.0
    %760 = vmatpush.msra.mxu0 0.0
    %761 = vmatpush.msra.mxu0 0.0
    %762 = vmatpush.msra.mxu0 0.0
    %763 = vmatpush.msra.mxu0 0.0
    %764 = vmatpush.msra.mxu0 0.0
    %765 = vmatpush.msra.mxu0 0.0
    %766 = vmatpush.msra.mxu0 0.0
    %767 = vmatpush.msra.mxu0 0.0
    %v768 = vand.u32 %v461, 4294901760
    %769 = vmatpush.msra.mxu0 %v768
    %v770 = vand.u32 %v478, 4294901760
    %v771 = vsub.f32 %v478, %v770
    %v772 = vand.u32 %v771, 4294901760
    %773 = vmatmul.f32.gmra.mxu0 %v772
    %v774 = vpop.f32.mrf.mxu0
    %v775 = vadd.f32 %v746, %v774
    %v776 = vand.u32 %v481, 4294901760
    %v777 = vsub.f32 %v481, %v776
    %v778 = vand.u32 %v777, 4294901760
    %779 = vmatmul.f32.gmra.mxu0 %v778
    %v780 = vpop.f32.mrf.mxu0
    %v781 = vadd.f32 %v751, %v780
    %782 = vdwg.mxu0
    %783 = vmatpush.msra.mxu0 0.0
    %784 = vmatpush.msra.mxu0 0.0
    %785 = vmatpush.msra.mxu0 0.0
    %786 = vmatpush.msra.mxu0 0.0
    %787 = vmatpush.msra.mxu0 0.0
    %788 = vmatpush.msra.mxu0 0.0
    %789 = vmatpush.msra.mxu0 0.0
    %790 = vmatpush.msra.mxu0 0.0
    %791 = vmatpush.msra.mxu0 0.0
    %792 = vmatpush.msra.mxu0 0.0
    %793 = vmatpush.msra.mxu0 0.0
    %794 = vmatpush.msra.mxu0 0.0
    %795 = vmatpush.msra.mxu0 0.0
    %796 = vmatpush.msra.mxu0 0.0
    %797 = vmatpush.msra.mxu0 0.0
    %v798 = vand.u32 %v461, 4294901760
    %v799 = vsub.f32 %v461, %v798
    %v800 = vand.u32 %v799, 4294901760
    %801 = vmatpush.msra.mxu0 %v800
    %v802 = vand.u32 %v478, 4294901760
    %803 = vmatmul.f32.gmra.mxu0 %v802
    %v804 = vpop.f32.mrf.mxu0
    %v805 = vadd.f32 %v775, %v804
    %v806 = vand.u32 %v481, 4294901760
    %807 = vmatmul.f32.gmra.mxu0 %v806
    %v808 = vpop.f32.mrf.mxu0
    %v809 = vadd.f32 %v781, %v808
    %810 = vdwg.mxu0
    %811 = vmatpush.msra.mxu0 0.0
    %812 = vmatpush.msra.mxu0 0.0
    %813 = vmatpush.msra.mxu0 0.0
    %814 = vmatpush.msra.mxu0 0.0
    %815 = vmatpush.msra.mxu0 0.0
    %816 = vmatpush.msra.mxu0 0.0
    %817 = vmatpush.msra.mxu0 0.0
    %818 = vmatpush.msra.mxu0 0.0
    %819 = vmatpush.msra.mxu0 0.0
    %820 = vmatpush.msra.mxu0 0.0
    %821 = vmatpush.msra.mxu0 0.0
    %822 = vmatpush.msra.mxu0 0.0
    %823 = vmatpush.msra.mxu0 0.0
    %824 = vmatpush.msra.mxu0 0.0
    %825 = vmatpush.msra.mxu0 0.0
    %v826 = vand.u32 %v461, 4294901760
    %827 = vmatpush.msra.mxu0 %v826
    %v828 = vand.u32 %v478, 4294901760
    %829 = vmatmul.f32.gmra.mxu0 %v828
    %v830 = vpop.f32.mrf.mxu0
    %v831 = vadd.f32 %v805, %v830
    %v832 = vand.u32 %v481, 4294901760
    %833 = vmatmul.f32.gmra.mxu0 %v832
    %v834 = vpop.f32.mrf.mxu0
    %v835 = vadd.f32 %v809, %v834
    %836 = vdwg.mxu0
    %v837 = vmul.f32 %v654, 0.5
    %v838 = vmul.f32 %v831, 0.5
    %v839 = vmul.f32 %v658, 0.5
    %v840 = vmul.f32 %v835, 0.5
    %v841 = vtanh.pop %v837
    %v842 = vtanh.pop %v838
    %v843 = vtanh.pop %v839
    %v844 = vtanh.pop %v840
    %v845 = vadd.f32 %v841, 1.0
    %v846 = vadd.f32 %v842, 1.0
    %v847 = vadd.f32 %v843, 1.0
    %v848 = vadd.f32 %v844, 1.0
    %v849 = vmul.f32 %v845, 0.5
    %v850 = vmul.f32 %v846, 0.5
    %v851 = vmul.f32 %v847, 0.5
    %v852 = vmul.f32 %v848, 0.5
    %v853 = vmul.f32 %v654, %v849
    %v854 = vmul.f32 %v831, %v850
    %v855 = vmul.f32 %v658, %v851
    %v856 = vmul.f32 %v835, %v852
    %v857 = vmul.f32 %v853, %v152
    %v858 = vmul.f32 %v854, %v153
    %v859 = vmul.f32 %v855, %v256
    %v860 = vmul.f32 %v856, %v257
    %s861 = scalar_lea.vmem %s6, 64
    %v862 = vld [vmem:[%s861] sm:$0xff]
    %v863 = vld [vmem:[%s861 + $0x8] sm:$0xff]
    %865 = vset.pattern.permute.xlu0 0
    %866 = vperm.xlu0 %865, %v862
    %v867 = vpop.permute.xlu0 %866
    %870 = vset.pattern.permute.xlu0 0
    %871 = vperm.xlu0 %870, %v863
    %v872 = vpop.permute.xlu0 %871
    %v874 = vmul.f32 %v857, %v867
    %v875 = vmul.f32 %v858, %v867
    %v876 = vmul.f32 %v859, %v872
    %v877 = vmul.f32 %v860, %v872
    %878 = vrot.lane.b32.xlu0 %v857, 17
    %v879 = vpop.permute.xlu0 %878
    %880 = vrot.lane.b32.xlu0 %v859, 17
    %v881 = vpop.permute.xlu0 %880
    %882 = vrot.lane.b32.xlu0 %v858, 17
    %v883 = vpop.permute.xlu0 %882
    %884 = vrot.lane.b32.xlu0 %v860, 17
    %v885 = vpop.permute.xlu0 %884
    %v886 = vsel %vm271, %v879, %v883
    %v887 = vsel %vm271, %v881, %v885
    %v888 = vsel %vm271, %v883, %v879
    %v889 = vsel %vm271, %v885, %v881
    %v890 = vsel %vm278, %v888, 0.0
    %v891 = vsel %vm279, %v886, 0.0
    %v892 = vsel %vm278, %v889, 0.0
    %v893 = vsel %vm279, %v887, 0.0
    %v894 = vld [vmem:[%s6] sm:$0xff]
    %v895 = vld [vmem:[%s6 + $0x8] sm:$0xff]
    %897 = vset.pattern.permute.xlu0 0
    %898 = vperm.xlu0 %897, %v894
    %v899 = vpop.permute.xlu0 %898
    %902 = vset.pattern.permute.xlu0 0
    %903 = vperm.xlu0 %902, %v895
    %v904 = vpop.permute.xlu0 %903
    %v906 = vmul.f32 %v890, %v899
    %v907 = vmul.f32 %v891, %v899
    %v908 = vmul.f32 %v892, %v904
    %v909 = vmul.f32 %v893, %v904
    %v910 = vadd.f32 %v874, %v906
    %v911 = vadd.f32 %v875, %v907
    %v912 = vadd.f32 %v876, %v908
    %v913 = vadd.f32 %v877, %v909
    %914 = vrot.lane.b32.xlu0 %v857, 16
    %v915 = vpop.permute.xlu0 %914
    %916 = vrot.lane.b32.xlu0 %v859, 16
    %v917 = vpop.permute.xlu0 %916
    %918 = vrot.lane.b32.xlu0 %v858, 16
    %v919 = vpop.permute.xlu0 %918
    %920 = vrot.lane.b32.xlu0 %v860, 16
    %v921 = vpop.permute.xlu0 %920
    %v922 = vsel %vm296, %v915, %v919
    %v923 = vsel %vm296, %v917, %v921
    %v924 = vsel %vm296, %v919, %v915
    %v925 = vsel %vm296, %v921, %v917
    %v926 = vsel %vm301, %v924, 0.0
    %v927 = vsel %vm302, %v922, 0.0
    %v928 = vsel %vm301, %v925, 0.0
    %v929 = vsel %vm302, %v923, 0.0
    %s930 = scalar_lea.vmem %s6, 16
    %v931 = vld [vmem:[%s930] sm:$0xff]
    %v932 = vld [vmem:[%s930 + $0x8] sm:$0xff]
    %934 = vset.pattern.permute.xlu0 0
    %935 = vperm.xlu0 %934, %v931
    %v936 = vpop.permute.xlu0 %935
    %939 = vset.pattern.permute.xlu0 0
    %940 = vperm.xlu0 %939, %v932
    %v941 = vpop.permute.xlu0 %940
    %v943 = vmul.f32 %v926, %v936
    %v944 = vmul.f32 %v927, %v936
    %v945 = vmul.f32 %v928, %v941
    %v946 = vmul.f32 %v929, %v941
    %v947 = vadd.f32 %v910, %v943
    %v948 = vadd.f32 %v911, %v944
    %v949 = vadd.f32 %v912, %v945
    %v950 = vadd.f32 %v913, %v946
    %951 = vrot.lane.b32.xlu0 %v857, 15
    %v952 = vpop.permute.xlu0 %951
    %953 = vrot.lane.b32.xlu0 %v859, 15
    %v954 = vpop.permute.xlu0 %953
    %955 = vrot.lane.b32.xlu0 %v858, 15
    %v956 = vpop.permute.xlu0 %955
    %957 = vrot.lane.b32.xlu0 %v860, 15
    %v958 = vpop.permute.xlu0 %957
    %v959 = vsel %vm320, %v952, %v956
    %v960 = vsel %vm320, %v954, %v958
    %v961 = vsel %vm320, %v956, %v952
    %v962 = vsel %vm320, %v958, %v954
    %v963 = vsel %vm327, %v961, 0.0
    %v964 = vsel %vm328, %v959, 0.0
    %v965 = vsel %vm327, %v962, 0.0
    %v966 = vsel %vm328, %v960, 0.0
    %s967 = scalar_lea.vmem %s6, 32
    %v968 = vld [vmem:[%s967] sm:$0xff]
    %v969 = vld [vmem:[%s967 + $0x8] sm:$0xff]
    %971 = vset.pattern.permute.xlu0 0
    %972 = vperm.xlu0 %971, %v968
    %v973 = vpop.permute.xlu0 %972
    %976 = vset.pattern.permute.xlu0 0
    %977 = vperm.xlu0 %976, %v969
    %v978 = vpop.permute.xlu0 %977
    %v980 = vmul.f32 %v963, %v973
    %v981 = vmul.f32 %v964, %v973
    %v982 = vmul.f32 %v965, %v978
    %v983 = vmul.f32 %v966, %v978
    %v984 = vadd.f32 %v947, %v980
    %v985 = vadd.f32 %v948, %v981
    %v986 = vadd.f32 %v949, %v982
    %v987 = vadd.f32 %v950, %v983
    %988 = vrot.lane.b32.xlu0 %v857, 1
    %v989 = vpop.permute.xlu0 %988
    %990 = vrot.lane.b32.xlu0 %v859, 1
    %v991 = vpop.permute.xlu0 %990
    %992 = vrot.lane.b32.xlu0 %v858, 1
    %v993 = vpop.permute.xlu0 %992
    %994 = vrot.lane.b32.xlu0 %v860, 1
    %v995 = vpop.permute.xlu0 %994
    %v996 = vsel %vm346, %v989, %v993
    %v997 = vsel %vm346, %v991, %v995
    %v998 = vsel %vm346, %v993, %v989
    %v999 = vsel %vm346, %v995, %v991
    %v1000 = vsel %vm349, %v998, 0.0
    %v1001 = vsel %vm350, %v996, 0.0
    %v1002 = vsel %vm349, %v999, 0.0
    %v1003 = vsel %vm350, %v997, 0.0
    %s1004 = scalar_lea.vmem %s6, 48
    %v1005 = vld [vmem:[%s1004] sm:$0xff]
    %v1006 = vld [vmem:[%s1004 + $0x8] sm:$0xff]
    %1008 = vset.pattern.permute.xlu0 0
    %1009 = vperm.xlu0 %1008, %v1005
    %v1010 = vpop.permute.xlu0 %1009
    %1013 = vset.pattern.permute.xlu0 0
    %1014 = vperm.xlu0 %1013, %v1006
    %v1015 = vpop.permute.xlu0 %1014
    %v1017 = vmul.f32 %v1000, %v1010
    %v1018 = vmul.f32 %v1001, %v1010
    %v1019 = vmul.f32 %v1002, %v1015
    %v1020 = vmul.f32 %v1003, %v1015
    %v1021 = vadd.f32 %v984, %v1017
    %v1022 = vadd.f32 %v985, %v1018
    %v1023 = vadd.f32 %v986, %v1019
    %v1024 = vadd.f32 %v987, %v1020
    %1025 = vrot.lane.b32.xlu0 %v857, 127
    %v1026 = vpop.permute.xlu0 %1025
    %1027 = vrot.lane.b32.xlu0 %v859, 127
    %v1028 = vpop.permute.xlu0 %1027
    %1029 = vrot.lane.b32.xlu0 %v858, 127
    %v1030 = vpop.permute.xlu0 %1029
    %1031 = vrot.lane.b32.xlu0 %v860, 127
    %v1032 = vpop.permute.xlu0 %1031
    %v1033 = vsel %vm368, %v1026, %v1030
    %v1034 = vsel %vm368, %v1028, %v1032
    %v1035 = vsel %vm368, %v1030, %v1026
    %v1036 = vsel %vm368, %v1032, %v1028
    %v1037 = vsel %vm371, %v1033, 0.0
    %v1038 = vsel %vm372, %v1035, 0.0
    %v1039 = vsel %vm371, %v1034, 0.0
    %v1040 = vsel %vm372, %v1036, 0.0
    %s1041 = scalar_lea.vmem %s6, 80
    %v1042 = vld [vmem:[%s1041] sm:$0xff]
    %v1043 = vld [vmem:[%s1041 + $0x8] sm:$0xff]
    %1045 = vset.pattern.permute.xlu0 0
    %1046 = vperm.xlu0 %1045, %v1042
    %v1047 = vpop.permute.xlu0 %1046
    %1050 = vset.pattern.permute.xlu0 0
    %1051 = vperm.xlu0 %1050, %v1043
    %v1052 = vpop.permute.xlu0 %1051
    %v1054 = vmul.f32 %v1037, %v1047
    %v1055 = vmul.f32 %v1038, %v1047
    %v1056 = vmul.f32 %v1039, %v1052
    %v1057 = vmul.f32 %v1040, %v1052
    %v1058 = vadd.f32 %v1021, %v1054
    %v1059 = vadd.f32 %v1022, %v1055
    %v1060 = vadd.f32 %v1023, %v1056
    %v1061 = vadd.f32 %v1024, %v1057
    %1062 = vrot.lane.b32.xlu0 %v857, 113
    %v1063 = vpop.permute.xlu0 %1062
    %1064 = vrot.lane.b32.xlu0 %v859, 113
    %v1065 = vpop.permute.xlu0 %1064
    %1066 = vrot.lane.b32.xlu0 %v858, 113
    %v1067 = vpop.permute.xlu0 %1066
    %1068 = vrot.lane.b32.xlu0 %v860, 113
    %v1069 = vpop.permute.xlu0 %1068
    %v1070 = vsel %vm390, %v1063, %v1067
    %v1071 = vsel %vm390, %v1065, %v1069
    %v1072 = vsel %vm390, %v1067, %v1063
    %v1073 = vsel %vm390, %v1069, %v1065
    %v1074 = vsel %vm397, %v1070, 0.0
    %v1075 = vsel %vm398, %v1072, 0.0
    %v1076 = vsel %vm397, %v1071, 0.0
    %v1077 = vsel %vm398, %v1073, 0.0
    %s1078 = scalar_lea.vmem %s6, 96
    %v1079 = vld [vmem:[%s1078] sm:$0xff]
    %v1080 = vld [vmem:[%s1078 + $0x8] sm:$0xff]
    %1082 = vset.pattern.permute.xlu0 0
    %1083 = vperm.xlu0 %1082, %v1079
    %v1084 = vpop.permute.xlu0 %1083
    %1087 = vset.pattern.permute.xlu0 0
    %1088 = vperm.xlu0 %1087, %v1080
    %v1089 = vpop.permute.xlu0 %1088
    %v1091 = vmul.f32 %v1074, %v1084
    %v1092 = vmul.f32 %v1075, %v1084
    %v1093 = vmul.f32 %v1076, %v1089
    %v1094 = vmul.f32 %v1077, %v1089
    %v1095 = vadd.f32 %v1058, %v1091
    %v1096 = vadd.f32 %v1059, %v1092
    %v1097 = vadd.f32 %v1060, %v1093
    %v1098 = vadd.f32 %v1061, %v1094
    %1099 = vrot.lane.b32.xlu0 %v857, 112
    %v1100 = vpop.permute.xlu0 %1099
    %1101 = vrot.lane.b32.xlu0 %v859, 112
    %v1102 = vpop.permute.xlu0 %1101
    %1103 = vrot.lane.b32.xlu0 %v858, 112
    %v1104 = vpop.permute.xlu0 %1103
    %1105 = vrot.lane.b32.xlu0 %v860, 112
    %v1106 = vpop.permute.xlu0 %1105
    %v1107 = vsel %vm416, %v1100, %v1104
    %v1108 = vsel %vm416, %v1102, %v1106
    %v1109 = vsel %vm416, %v1104, %v1100
    %v1110 = vsel %vm416, %v1106, %v1102
    %v1111 = vsel %vm421, %v1107, 0.0
    %v1112 = vsel %vm422, %v1109, 0.0
    %v1113 = vsel %vm421, %v1108, 0.0
    %v1114 = vsel %vm422, %v1110, 0.0
    %s1115 = scalar_lea.vmem %s6, 112
    %v1116 = vld [vmem:[%s1115] sm:$0xff]
    %v1117 = vld [vmem:[%s1115 + $0x8] sm:$0xff]
    %1119 = vset.pattern.permute.xlu0 0
    %1120 = vperm.xlu0 %1119, %v1116
    %v1121 = vpop.permute.xlu0 %1120
    %1124 = vset.pattern.permute.xlu0 0
    %1125 = vperm.xlu0 %1124, %v1117
    %v1126 = vpop.permute.xlu0 %1125
    %v1128 = vmul.f32 %v1111, %v1121
    %v1129 = vmul.f32 %v1112, %v1121
    %v1130 = vmul.f32 %v1113, %v1126
    %v1131 = vmul.f32 %v1114, %v1126
    %v1132 = vadd.f32 %v1095, %v1128
    %v1133 = vadd.f32 %v1096, %v1129
    %v1134 = vadd.f32 %v1097, %v1130
    %v1135 = vadd.f32 %v1098, %v1131
    %1136 = vrot.lane.b32.xlu0 %v857, 111
    %v1137 = vpop.permute.xlu0 %1136
    %1138 = vrot.lane.b32.xlu0 %v859, 111
    %v1139 = vpop.permute.xlu0 %1138
    %1140 = vrot.lane.b32.xlu0 %v858, 111
    %v1141 = vpop.permute.xlu0 %1140
    %1142 = vrot.lane.b32.xlu0 %v860, 111
    %v1143 = vpop.permute.xlu0 %1142
    %v1144 = vsel %vm440, %v1137, %v1141
    %v1145 = vsel %vm440, %v1139, %v1143
    %v1146 = vsel %vm440, %v1141, %v1137
    %v1147 = vsel %vm440, %v1143, %v1139
    %v1148 = vsel %vm447, %v1144, 0.0
    %v1149 = vsel %vm448, %v1146, 0.0
    %v1150 = vsel %vm447, %v1145, 0.0
    %v1151 = vsel %vm448, %v1147, 0.0
    %s1152 = scalar_lea.vmem %s6, 128
    %v1153 = vld [vmem:[%s1152] sm:$0xff]
    %v1154 = vld [vmem:[%s1152 + $0x8] sm:$0xff]
    %1156 = vset.pattern.permute.xlu0 0
    %1157 = vperm.xlu0 %1156, %v1153
    %v1158 = vpop.permute.xlu0 %1157
    %1161 = vset.pattern.permute.xlu0 0
    %1162 = vperm.xlu0 %1161, %v1154
    %v1163 = vpop.permute.xlu0 %1162
    %v1165 = vmul.f32 %v1148, %v1158
    %v1166 = vmul.f32 %v1149, %v1158
    %v1167 = vmul.f32 %v1150, %v1163
    %v1168 = vmul.f32 %v1151, %v1163
    %v1169 = vadd.f32 %v1132, %v1165
    %v1170 = vadd.f32 %v1133, %v1166
    %v1171 = vadd.f32 %v1134, %v1167
    %v1172 = vadd.f32 %v1135, %v1168
    %v1173 = vld [vmem:[%s7] sm:$0xff]
    %v1174 = vld [vmem:[%s7 + $0x8] sm:$0xff]
    %v1175 = vld [vmem:[%s8] sm:$0xff]
    %v1176 = vld [vmem:[%s8 + $0x8] sm:$0xff]
    %1178 = vset.pattern.permute.xlu0 0
    %1179 = vperm.xlu0 %1178, %v1175
    %v1180 = vpop.permute.xlu0 %1179
    %1183 = vset.pattern.permute.xlu0 0
    %1184 = vperm.xlu0 %1183, %v1176
    %v1185 = vpop.permute.xlu0 %1184
    %vm1187 = vcmask 130048
    %v1189 = vsel %vm1187, %v1173, 0
    %v1192 = vsel %vm1187, %v1174, 0
    %1194 = vmatpush.msra.mxu0 0.0
    %1195 = vmatpush.msra.mxu0 0.0
    %1196 = vmatpush.msra.mxu0 0.0
    %1197 = vmatpush.msra.mxu0 0.0
    %1198 = vmatpush.msra.mxu0 0.0
    %1199 = vmatpush.msra.mxu0 0.0
    %1200 = vmatpush.msra.mxu0 0.0
    %1201 = vmatpush.msra.mxu0 0.0
    %1202 = vmatpush.msra.mxu0 0.0
    %1203 = vmatpush.msra.mxu0 0.0
    %1204 = vmatpush.msra.mxu0 0.0
    %1205 = vmatpush.msra.mxu0 0.0
    %1206 = vmatpush.msra.mxu0 0.0
    %1207 = vmatpush.msra.mxu0 0.0
    %v1208 = vand.u32 %v1171, 4294901760
    %1209 = vmatpush.msra.mxu0 %v1208
    %v1210 = vand.u32 %v1169, 4294901760
    %1211 = vmatpush.msra.mxu0 %v1210
    %v1212 = vand.u32 %v1189, 4294901760
    %v1213 = vsub.f32 %v1189, %v1212
    %v1214 = vand.u32 %v1213, 4294901760
    %v1215 = vsub.f32 %v1213, %v1214
    %v1216 = vand.u32 %v1215, 4294901760
    %1217 = vmatmul.f32.gmra.mxu0 %v1216
    %v1218 = vpop.f32.mrf.mxu0
    %v1219 = vadd.f32 %v1180, %v1218
    %v1220 = vand.u32 %v1192, 4294901760
    %v1221 = vsub.f32 %v1192, %v1220
    %v1222 = vand.u32 %v1221, 4294901760
    %v1223 = vsub.f32 %v1221, %v1222
    %v1224 = vand.u32 %v1223, 4294901760
    %1225 = vmatmul.f32.gmra.mxu0 %v1224
    %v1226 = vpop.f32.mrf.mxu0
    %v1227 = vadd.f32 %v1185, %v1226
    %1228 = vdwg.mxu0
    %1229 = vmatpush.msra.mxu0 0.0
    %1230 = vmatpush.msra.mxu0 0.0
    %1231 = vmatpush.msra.mxu0 0.0
    %1232 = vmatpush.msra.mxu0 0.0
    %1233 = vmatpush.msra.mxu0 0.0
    %1234 = vmatpush.msra.mxu0 0.0
    %1235 = vmatpush.msra.mxu0 0.0
    %1236 = vmatpush.msra.mxu0 0.0
    %1237 = vmatpush.msra.mxu0 0.0
    %1238 = vmatpush.msra.mxu0 0.0
    %1239 = vmatpush.msra.mxu0 0.0
    %1240 = vmatpush.msra.mxu0 0.0
    %1241 = vmatpush.msra.mxu0 0.0
    %1242 = vmatpush.msra.mxu0 0.0
    %v1243 = vand.u32 %v1171, 4294901760
    %v1244 = vsub.f32 %v1171, %v1243
    %v1245 = vand.u32 %v1244, 4294901760
    %v1246 = vsub.f32 %v1244, %v1245
    %v1247 = vand.u32 %v1246, 4294901760
    %1248 = vmatpush.msra.mxu0 %v1247
    %v1249 = vand.u32 %v1169, 4294901760
    %v1250 = vsub.f32 %v1169, %v1249
    %v1251 = vand.u32 %v1250, 4294901760
    %v1252 = vsub.f32 %v1250, %v1251
    %v1253 = vand.u32 %v1252, 4294901760
    %1254 = vmatpush.msra.mxu0 %v1253
    %v1255 = vand.u32 %v1189, 4294901760
    %1256 = vmatmul.f32.gmra.mxu0 %v1255
    %v1257 = vpop.f32.mrf.mxu0
    %v1258 = vadd.f32 %v1219, %v1257
    %v1259 = vand.u32 %v1192, 4294901760
    %1260 = vmatmul.f32.gmra.mxu0 %v1259
    %v1261 = vpop.f32.mrf.mxu0
    %v1262 = vadd.f32 %v1227, %v1261
    %1263 = vdwg.mxu0
    %1264 = vmatpush.msra.mxu0 0.0
    %1265 = vmatpush.msra.mxu0 0.0
    %1266 = vmatpush.msra.mxu0 0.0
    %1267 = vmatpush.msra.mxu0 0.0
    %1268 = vmatpush.msra.mxu0 0.0
    %1269 = vmatpush.msra.mxu0 0.0
    %1270 = vmatpush.msra.mxu0 0.0
    %1271 = vmatpush.msra.mxu0 0.0
    %1272 = vmatpush.msra.mxu0 0.0
    %1273 = vmatpush.msra.mxu0 0.0
    %1274 = vmatpush.msra.mxu0 0.0
    %1275 = vmatpush.msra.mxu0 0.0
    %1276 = vmatpush.msra.mxu0 0.0
    %1277 = vmatpush.msra.mxu0 0.0
    %v1278 = vand.u32 %v1171, 4294901760
    %v1279 = vsub.f32 %v1171, %v1278
    %1280 = vmatpush.msra.mxu0 %v1279
    %v1281 = vand.u32 %v1169, 4294901760
    %v1282 = vsub.f32 %v1169, %v1281
    %1283 = vmatpush.msra.mxu0 %v1282
    %v1284 = vand.u32 %v1189, 4294901760
    %v1285 = vsub.f32 %v1189, %v1284
    %1286 = vmatmul.f32.gmra.mxu0 %v1285
    %v1287 = vpop.f32.mrf.mxu0
    %v1288 = vadd.f32 %v1258, %v1287
    %v1289 = vand.u32 %v1192, 4294901760
    %v1290 = vsub.f32 %v1192, %v1289
    %1291 = vmatmul.f32.gmra.mxu0 %v1290
    %v1292 = vpop.f32.mrf.mxu0
    %v1293 = vadd.f32 %v1262, %v1292
    %1294 = vdwg.mxu0
    %1295 = vmatpush.msra.mxu0 0.0
    %1296 = vmatpush.msra.mxu0 0.0
    %1297 = vmatpush.msra.mxu0 0.0
    %1298 = vmatpush.msra.mxu0 0.0
    %1299 = vmatpush.msra.mxu0 0.0
    %1300 = vmatpush.msra.mxu0 0.0
    %1301 = vmatpush.msra.mxu0 0.0
    %1302 = vmatpush.msra.mxu0 0.0
    %1303 = vmatpush.msra.mxu0 0.0
    %1304 = vmatpush.msra.mxu0 0.0
    %1305 = vmatpush.msra.mxu0 0.0
    %1306 = vmatpush.msra.mxu0 0.0
    %1307 = vmatpush.msra.mxu0 0.0
    %1308 = vmatpush.msra.mxu0 0.0
    %v1309 = vand.u32 %v1171, 4294901760
    %1310 = vmatpush.msra.mxu0 %v1309
    %v1311 = vand.u32 %v1169, 4294901760
    %1312 = vmatpush.msra.mxu0 %v1311
    %v1313 = vand.u32 %v1189, 4294901760
    %v1314 = vsub.f32 %v1189, %v1313
    %v1315 = vand.u32 %v1314, 4294901760
    %1316 = vmatmul.f32.gmra.mxu0 %v1315
    %v1317 = vpop.f32.mrf.mxu0
    %v1318 = vadd.f32 %v1288, %v1317
    %v1319 = vand.u32 %v1192, 4294901760
    %v1320 = vsub.f32 %v1192, %v1319
    %v1321 = vand.u32 %v1320, 4294901760
    %1322 = vmatmul.f32.gmra.mxu0 %v1321
    %v1323 = vpop.f32.mrf.mxu0
    %v1324 = vadd.f32 %v1293, %v1323
    %1325 = vdwg.mxu0
    %1326 = vmatpush.msra.mxu0 0.0
    %1327 = vmatpush.msra.mxu0 0.0
    %1328 = vmatpush.msra.mxu0 0.0
    %1329 = vmatpush.msra.mxu0 0.0
    %1330 = vmatpush.msra.mxu0 0.0
    %1331 = vmatpush.msra.mxu0 0.0
    %1332 = vmatpush.msra.mxu0 0.0
    %1333 = vmatpush.msra.mxu0 0.0
    %1334 = vmatpush.msra.mxu0 0.0
    %1335 = vmatpush.msra.mxu0 0.0
    %1336 = vmatpush.msra.mxu0 0.0
    %1337 = vmatpush.msra.mxu0 0.0
    %1338 = vmatpush.msra.mxu0 0.0
    %1339 = vmatpush.msra.mxu0 0.0
    %v1340 = vand.u32 %v1171, 4294901760
    %v1341 = vsub.f32 %v1171, %v1340
    %v1342 = vand.u32 %v1341, 4294901760
    %1343 = vmatpush.msra.mxu0 %v1342
    %v1344 = vand.u32 %v1169, 4294901760
    %v1345 = vsub.f32 %v1169, %v1344
    %v1346 = vand.u32 %v1345, 4294901760
    %1347 = vmatpush.msra.mxu0 %v1346
    %v1348 = vand.u32 %v1189, 4294901760
    %1349 = vmatmul.f32.gmra.mxu0 %v1348
    %v1350 = vpop.f32.mrf.mxu0
    %v1351 = vadd.f32 %v1318, %v1350
    %v1352 = vand.u32 %v1192, 4294901760
    %1353 = vmatmul.f32.gmra.mxu0 %v1352
    %v1354 = vpop.f32.mrf.mxu0
    %v1355 = vadd.f32 %v1324, %v1354
    %1356 = vdwg.mxu0
    %1357 = vmatpush.msra.mxu0 0.0
    %1358 = vmatpush.msra.mxu0 0.0
    %1359 = vmatpush.msra.mxu0 0.0
    %1360 = vmatpush.msra.mxu0 0.0
    %1361 = vmatpush.msra.mxu0 0.0
    %1362 = vmatpush.msra.mxu0 0.0
    %1363 = vmatpush.msra.mxu0 0.0
    %1364 = vmatpush.msra.mxu0 0.0
    %1365 = vmatpush.msra.mxu0 0.0
    %1366 = vmatpush.msra.mxu0 0.0
    %1367 = vmatpush.msra.mxu0 0.0
    %1368 = vmatpush.msra.mxu0 0.0
    %1369 = vmatpush.msra.mxu0 0.0
    %1370 = vmatpush.msra.mxu0 0.0
    %v1371 = vand.u32 %v1171, 4294901760
    %1372 = vmatpush.msra.mxu0 %v1371
    %v1373 = vand.u32 %v1169, 4294901760
    %1374 = vmatpush.msra.mxu0 %v1373
    %v1375 = vand.u32 %v1189, 4294901760
    %1376 = vmatmul.f32.gmra.mxu0 %v1375
    %v1377 = vpop.f32.mrf.mxu0
    %v1378 = vadd.f32 %v1351, %v1377
    %v1379 = vand.u32 %v1192, 4294901760
    %1380 = vmatmul.f32.gmra.mxu0 %v1379
    %v1381 = vpop.f32.mrf.mxu0
    %v1382 = vadd.f32 %v1355, %v1381
    %1383 = vdwg.mxu0
    %1384 = vmatpush.msra.mxu0 0.0
    %1385 = vmatpush.msra.mxu0 0.0
    %1386 = vmatpush.msra.mxu0 0.0
    %1387 = vmatpush.msra.mxu0 0.0
    %1388 = vmatpush.msra.mxu0 0.0
    %1389 = vmatpush.msra.mxu0 0.0
    %1390 = vmatpush.msra.mxu0 0.0
    %1391 = vmatpush.msra.mxu0 0.0
    %1392 = vmatpush.msra.mxu0 0.0
    %1393 = vmatpush.msra.mxu0 0.0
    %1394 = vmatpush.msra.mxu0 0.0
    %1395 = vmatpush.msra.mxu0 0.0
    %1396 = vmatpush.msra.mxu0 0.0
    %1397 = vmatpush.msra.mxu0 0.0
    %v1398 = vand.u32 %v1172, 4294901760
    %1399 = vmatpush.msra.mxu0 %v1398
    %v1400 = vand.u32 %v1170, 4294901760
    %1401 = vmatpush.msra.mxu0 %v1400
    %v1402 = vand.u32 %v1189, 4294901760
    %v1403 = vsub.f32 %v1189, %v1402
    %v1404 = vand.u32 %v1403, 4294901760
    %v1405 = vsub.f32 %v1403, %v1404
    %v1406 = vand.u32 %v1405, 4294901760
    %1407 = vmatmul.f32.gmra.mxu0 %v1406
    %v1408 = vpop.f32.mrf.mxu0
    %v1409 = vadd.f32 %v1180, %v1408
    %v1410 = vand.u32 %v1192, 4294901760
    %v1411 = vsub.f32 %v1192, %v1410
    %v1412 = vand.u32 %v1411, 4294901760
    %v1413 = vsub.f32 %v1411, %v1412
    %v1414 = vand.u32 %v1413, 4294901760
    %1415 = vmatmul.f32.gmra.mxu0 %v1414
    %v1416 = vpop.f32.mrf.mxu0
    %v1417 = vadd.f32 %v1185, %v1416
    %1418 = vdwg.mxu0
    %1419 = vmatpush.msra.mxu0 0.0
    %1420 = vmatpush.msra.mxu0 0.0
    %1421 = vmatpush.msra.mxu0 0.0
    %1422 = vmatpush.msra.mxu0 0.0
    %1423 = vmatpush.msra.mxu0 0.0
    %1424 = vmatpush.msra.mxu0 0.0
    %1425 = vmatpush.msra.mxu0 0.0
    %1426 = vmatpush.msra.mxu0 0.0
    %1427 = vmatpush.msra.mxu0 0.0
    %1428 = vmatpush.msra.mxu0 0.0
    %1429 = vmatpush.msra.mxu0 0.0
    %1430 = vmatpush.msra.mxu0 0.0
    %1431 = vmatpush.msra.mxu0 0.0
    %1432 = vmatpush.msra.mxu0 0.0
    %v1433 = vand.u32 %v1172, 4294901760
    %v1434 = vsub.f32 %v1172, %v1433
    %v1435 = vand.u32 %v1434, 4294901760
    %v1436 = vsub.f32 %v1434, %v1435
    %v1437 = vand.u32 %v1436, 4294901760
    %1438 = vmatpush.msra.mxu0 %v1437
    %v1439 = vand.u32 %v1170, 4294901760
    %v1440 = vsub.f32 %v1170, %v1439
    %v1441 = vand.u32 %v1440, 4294901760
    %v1442 = vsub.f32 %v1440, %v1441
    %v1443 = vand.u32 %v1442, 4294901760
    %1444 = vmatpush.msra.mxu0 %v1443
    %v1445 = vand.u32 %v1189, 4294901760
    %1446 = vmatmul.f32.gmra.mxu0 %v1445
    %v1447 = vpop.f32.mrf.mxu0
    %v1448 = vadd.f32 %v1409, %v1447
    %v1449 = vand.u32 %v1192, 4294901760
    %1450 = vmatmul.f32.gmra.mxu0 %v1449
    %v1451 = vpop.f32.mrf.mxu0
    %v1452 = vadd.f32 %v1417, %v1451
    %1453 = vdwg.mxu0
    %1454 = vmatpush.msra.mxu0 0.0
    %1455 = vmatpush.msra.mxu0 0.0
    %1456 = vmatpush.msra.mxu0 0.0
    %1457 = vmatpush.msra.mxu0 0.0
    %1458 = vmatpush.msra.mxu0 0.0
    %1459 = vmatpush.msra.mxu0 0.0
    %1460 = vmatpush.msra.mxu0 0.0
    %1461 = vmatpush.msra.mxu0 0.0
    %1462 = vmatpush.msra.mxu0 0.0
    %1463 = vmatpush.msra.mxu0 0.0
    %1464 = vmatpush.msra.mxu0 0.0
    %1465 = vmatpush.msra.mxu0 0.0
    %1466 = vmatpush.msra.mxu0 0.0
    %1467 = vmatpush.msra.mxu0 0.0
    %v1468 = vand.u32 %v1172, 4294901760
    %v1469 = vsub.f32 %v1172, %v1468
    %1470 = vmatpush.msra.mxu0 %v1469
    %v1471 = vand.u32 %v1170, 4294901760
    %v1472 = vsub.f32 %v1170, %v1471
    %1473 = vmatpush.msra.mxu0 %v1472
    %v1474 = vand.u32 %v1189, 4294901760
    %v1475 = vsub.f32 %v1189, %v1474
    %1476 = vmatmul.f32.gmra.mxu0 %v1475
    %v1477 = vpop.f32.mrf.mxu0
    %v1478 = vadd.f32 %v1448, %v1477
    %v1479 = vand.u32 %v1192, 4294901760
    %v1480 = vsub.f32 %v1192, %v1479
    %1481 = vmatmul.f32.gmra.mxu0 %v1480
    %v1482 = vpop.f32.mrf.mxu0
    %v1483 = vadd.f32 %v1452, %v1482
    %1484 = vdwg.mxu0
    %1485 = vmatpush.msra.mxu0 0.0
    %1486 = vmatpush.msra.mxu0 0.0
    %1487 = vmatpush.msra.mxu0 0.0
    %1488 = vmatpush.msra.mxu0 0.0
    %1489 = vmatpush.msra.mxu0 0.0
    %1490 = vmatpush.msra.mxu0 0.0
    %1491 = vmatpush.msra.mxu0 0.0
    %1492 = vmatpush.msra.mxu0 0.0
    %1493 = vmatpush.msra.mxu0 0.0
    %1494 = vmatpush.msra.mxu0 0.0
    %1495 = vmatpush.msra.mxu0 0.0
    %1496 = vmatpush.msra.mxu0 0.0
    %1497 = vmatpush.msra.mxu0 0.0
    %1498 = vmatpush.msra.mxu0 0.0
    %v1499 = vand.u32 %v1172, 4294901760
    %1500 = vmatpush.msra.mxu0 %v1499
    %v1501 = vand.u32 %v1170, 4294901760
    %1502 = vmatpush.msra.mxu0 %v1501
    %v1503 = vand.u32 %v1189, 4294901760
    %v1504 = vsub.f32 %v1189, %v1503
    %v1505 = vand.u32 %v1504, 4294901760
    %1506 = vmatmul.f32.gmra.mxu0 %v1505
    %v1507 = vpop.f32.mrf.mxu0
    %v1508 = vadd.f32 %v1478, %v1507
    %v1509 = vand.u32 %v1192, 4294901760
    %v1510 = vsub.f32 %v1192, %v1509
    %v1511 = vand.u32 %v1510, 4294901760
    %1512 = vmatmul.f32.gmra.mxu0 %v1511
    %v1513 = vpop.f32.mrf.mxu0
    %v1514 = vadd.f32 %v1483, %v1513
    %1515 = vdwg.mxu0
    %1516 = vmatpush.msra.mxu0 0.0
    %1517 = vmatpush.msra.mxu0 0.0
    %1518 = vmatpush.msra.mxu0 0.0
    %1519 = vmatpush.msra.mxu0 0.0
    %1520 = vmatpush.msra.mxu0 0.0
    %1521 = vmatpush.msra.mxu0 0.0
    %1522 = vmatpush.msra.mxu0 0.0
    %1523 = vmatpush.msra.mxu0 0.0
    %1524 = vmatpush.msra.mxu0 0.0
    %1525 = vmatpush.msra.mxu0 0.0
    %1526 = vmatpush.msra.mxu0 0.0
    %1527 = vmatpush.msra.mxu0 0.0
    %1528 = vmatpush.msra.mxu0 0.0
    %1529 = vmatpush.msra.mxu0 0.0
    %v1530 = vand.u32 %v1172, 4294901760
    %v1531 = vsub.f32 %v1172, %v1530
    %v1532 = vand.u32 %v1531, 4294901760
    %1533 = vmatpush.msra.mxu0 %v1532
    %v1534 = vand.u32 %v1170, 4294901760
    %v1535 = vsub.f32 %v1170, %v1534
    %v1536 = vand.u32 %v1535, 4294901760
    %1537 = vmatpush.msra.mxu0 %v1536
    %v1538 = vand.u32 %v1189, 4294901760
    %1539 = vmatmul.f32.gmra.mxu0 %v1538
    %v1540 = vpop.f32.mrf.mxu0
    %v1541 = vadd.f32 %v1508, %v1540
    %v1542 = vand.u32 %v1192, 4294901760
    %1543 = vmatmul.f32.gmra.mxu0 %v1542
    %v1544 = vpop.f32.mrf.mxu0
    %v1545 = vadd.f32 %v1514, %v1544
    %1546 = vdwg.mxu0
    %1547 = vmatpush.msra.mxu0 0.0
    %1548 = vmatpush.msra.mxu0 0.0
    %1549 = vmatpush.msra.mxu0 0.0
    %1550 = vmatpush.msra.mxu0 0.0
    %1551 = vmatpush.msra.mxu0 0.0
    %1552 = vmatpush.msra.mxu0 0.0
    %1553 = vmatpush.msra.mxu0 0.0
    %1554 = vmatpush.msra.mxu0 0.0
    %1555 = vmatpush.msra.mxu0 0.0
    %1556 = vmatpush.msra.mxu0 0.0
    %1557 = vmatpush.msra.mxu0 0.0
    %1558 = vmatpush.msra.mxu0 0.0
    %1559 = vmatpush.msra.mxu0 0.0
    %1560 = vmatpush.msra.mxu0 0.0
    %v1561 = vand.u32 %v1172, 4294901760
    %1562 = vmatpush.msra.mxu0 %v1561
    %v1563 = vand.u32 %v1170, 4294901760
    %1564 = vmatpush.msra.mxu0 %v1563
    %v1565 = vand.u32 %v1189, 4294901760
    %1566 = vmatmul.f32.gmra.mxu0 %v1565
    %v1567 = vpop.f32.mrf.mxu0
    %v1568 = vadd.f32 %v1541, %v1567
    %v1569 = vand.u32 %v1192, 4294901760
    %1570 = vmatmul.f32.gmra.mxu0 %v1569
    %v1571 = vpop.f32.mrf.mxu0
    %v1572 = vadd.f32 %v1545, %v1571
    %1573 = vdwg.mxu0
    %v1574 = vmul.f32 %v1378, 0.5
    %v1575 = vmul.f32 %v1568, 0.5
    %v1576 = vmul.f32 %v1382, 0.5
    %v1577 = vmul.f32 %v1572, 0.5
    %v1578 = vtanh.pop %v1574
    %v1579 = vtanh.pop %v1575
    %v1580 = vtanh.pop %v1576
    %v1581 = vtanh.pop %v1577
    %v1582 = vadd.f32 %v1578, 1.0
    %v1583 = vadd.f32 %v1579, 1.0
    %v1584 = vadd.f32 %v1580, 1.0
    %v1585 = vadd.f32 %v1581, 1.0
    %v1586 = vmul.f32 %v1582, 0.5
    %v1587 = vmul.f32 %v1583, 0.5
    %v1588 = vmul.f32 %v1584, 0.5
    %v1589 = vmul.f32 %v1585, 0.5
    %v1590 = vmul.f32 %v1378, %v1586
    %v1591 = vmul.f32 %v1568, %v1587
    %v1592 = vmul.f32 %v1382, %v1588
    %v1593 = vmul.f32 %v1572, %v1589
    %v1594 = vadd.f32 %v1590, %v853
    %v1595 = vadd.f32 %v1591, %v854
    %v1596 = vadd.f32 %v1592, %v855
    %v1597 = vadd.f32 %v1593, %v856
    %1598 = vst [vmem:[#allocation2] sm:$0xff] %v1594
    %1599 = vst [vmem:[#allocation2 + $0x8] sm:$0xff] %v1595
    %1600 = vst [vmem:[#allocation2 + $0x10] sm:$0xff] %v1596
    %1601 = vst [vmem:[#allocation2 + $0x18] sm:$0xff] %v1597
    // Predicated region
    $region38: #{tpu_custom_call.1} parent=1 // pred_check
      _
    $region39: #{tpu_custom_call.1} parent=1 // pred_check_branch
      %1603 = sbr.rel (0) target = $region41
    $region40: #{tpu_custom_call.1} parent=1 // pred_region
      %1605 = vsyncadd [#allocation3], 0
      %s1606 = sshll.u32 [#allocation2], 4
      %s1607 = int_to_ptr.vmem [resolvable:$true] %s1606
      %s1608 = sshll.u32 %s9, 4
      %s1609 = int_to_ptr.hbm [resolvable:$true] %s1608
      %1614 = dma.vmem_to_hbm [thread:$0]  %s1607, 512, %s1609, [#allocation3], 256, 256, 16
    $region41: #{tpu_custom_call.1} parent=1 // pred_fallthru
      _
    // Predicated region
    $region42: #{tpu_custom_call.1} parent=1 // pred_check
      _
    $region43: #{tpu_custom_call.1} parent=1 // pred_check_branch
      %1616 = sbr.rel (0) target = $region45
    $region44: #{tpu_custom_call.1} parent=1 // pred_region
      %1618 = dma.done [#allocation3], 512
    $region45: #{tpu_custom_call.1} parent=1 // pred_fallthru
      _
    %1619 = vsyncpa [#allocation3], 1

</llo_original>
